<compile_context>
chip_gen: v7x
topology: tpu7x:2x2x1
jax: 0.10.0
libtpu: 0.0.40
codegen_flags: <defaults>
</compile_context>

<pallas_src>
import math
import functools

import numpy as np
import jax
import jax.numpy as jnp
from jax.experimental import pallas as pl
from jax.experimental.pallas import tpu as pltpu

LN_EPS = 1e-5      # torch.nn.LayerNorm default
NEG_INF = -1e30    # finite large-negative mask value (avoids NaN on all-masked rows)


# ---------------------------------------------------------------------------
# tiling helpers
# ---------------------------------------------------------------------------

def _row_tile(n, cap=512):
    # largest row tile (multiple of 16, bf16-friendly) that divides n; else full n
    for cand in (1024, 512, 256, 128, 64, 32, 16):
        if cand <= cap and n % cand == 0:
            return cand
    return n


def _seq_tile(s):
    # query tile for attention; multiple of 16 dividing S, else full S
    for cand in (256, 128, 64, 32, 16):
        if s % cand == 0:
            return cand
    return s


def _ffn_tile(f):
    # K-tile over the FFN hidden dim so w1/w2 need not be fully VMEM-resident
    if f <= 1024:
        return f
    for cand in (1024, 512, 256, 128):
        if f % cand == 0:
            return cand
    return f


def _vmem_params(sems, est_bytes):
    # explicit scoped-VMEM limit: >= generation defaults, <= v7x physical per-core
    limit = int(min(max(2 * est_bytes + (8 << 20), 32 << 20), 64 << 20))
    return pltpu.CompilerParams(dimension_semantics=sems, vmem_limit_bytes=limit)


# ---------------------------------------------------------------------------
# Pallas kernels
# ---------------------------------------------------------------------------

def _embed_kernel(seq_ref, t_ref, pos_ref, wsel_ref, bsel_ref,
                  wt_ref, bt_ref, bias_ref, o_ref):
    # time_feature = time_layer(1 - tanh(selection_layer(t)^2))
    # out = seq_emb + bias_embedding + time_feature + pos_embedding
    t = t_ref[...]                                        # (TM, 1)
    sel = t * wsel_ref[...] + bsel_ref[...]               # (TM, T0)  Linear(1, T0)
    tf = 1.0 - jnp.tanh(sel * sel)
    tf = jnp.dot(tf, wt_ref[...], preferred_element_type=jnp.float32) + bt_ref[...]
    o_ref[...] = seq_ref[...] + bias_ref[...] + tf + pos_ref[...]


def _qkv_kernel(x_ref, wk_ref, wv_ref, wq_ref, bk_ref, bv_ref, bq_ref,
                ok_ref, ov_ref, oq_ref, *, scale):
    # fused K / V / Q projections; bf16 MXU operands, f32 accumulation;
    # softmax scale folded into Q (in f32, before the bf16 store)
    xb = x_ref[...].astype(jnp.bfloat16)
    k = jnp.dot(xb, wk_ref[...], preferred_element_type=jnp.float32) + bk_ref[...]
    v = jnp.dot(xb, wv_ref[...], preferred_element_type=jnp.float32) + bv_ref[...]
    q = jnp.dot(xb, wq_ref[...], preferred_element_type=jnp.float32) + bq_ref[...]
    ok_ref[...] = k.astype(ok_ref.dtype)
    ov_ref[...] = v.astype(ov_ref.dtype)
    oq_ref[...] = (q * scale).astype(oq_ref.dtype)


def _attn_kernel(q_ref, k_ref, v_ref, bias_ref, o_ref):
    # one (view-head, query-tile) block of scaled dot-product attention
    q = q_ref[...]                                        # (TQ, d) bf16, pre-scaled
    k = k_ref[...]                                        # (S,  d) bf16
    v = v_ref[...]                                        # (S,  d) bf16
    s = jax.lax.dot_general(q, k, (((1,), (1,)), ((), ())),
                            preferred_element_type=jnp.float32)      # (TQ, S) f32
    s = s + bias_ref[...]                                 # additive key-pad bias (1,S)
    mx = jnp.max(s, axis=-1, keepdims=True)
    e = jnp.exp(s - mx)
    denom = jnp.sum(e, axis=-1, keepdims=True)
    p = (e / denom).astype(jnp.bfloat16)
    o_ref[...] = jnp.dot(p, v, preferred_element_type=jnp.float32).astype(o_ref.dtype)


def _post_attn_kernel(ctx_ref, res_ref, wo_ref, bo_ref, g1_ref, bln1_ref,
                      w1_ref, b1_ref, w2_ref, b2_ref, g2_ref, bln2_ref,
                      o_ref, y_scr, ff_scr):
    # out-proj -> residual add + LayerNorm -> conv1d(k=1) FFN (ReLU, K-tiled over F)
    # -> residual add + LayerNorm
    f = pl.program_id(1)
    nf = pl.num_programs(1)

    @pl.when(f == 0)
    def _():
        attn = (jnp.dot(ctx_ref[...], wo_ref[...],
                        preferred_element_type=jnp.float32) + bo_ref[...])
        y = res_ref[...] + attn
        mu = jnp.mean(y, axis=-1, keepdims=True)
        var = jnp.mean((y - mu) ** 2, axis=-1, keepdims=True)
        y_scr[...] = (y - mu) * jax.lax.rsqrt(var + LN_EPS) * g1_ref[...] + bln1_ref[...]
        ff_scr[...] = jnp.zeros_like(ff_scr)

    yb = y_scr[...].astype(jnp.bfloat16)
    h = jnp.maximum(
        jnp.dot(yb, w1_ref[...], preferred_element_type=jnp.float32) + b1_ref[...], 0.0)
    ff_scr[...] += jnp.dot(h.astype(jnp.bfloat16), w2_ref[...],
                           preferred_element_type=jnp.float32)

    @pl.when(f == nf - 1)
    def _():
        z = y_scr[...] + ff_scr[...] + b2_ref[...]
        mu2 = jnp.mean(z, axis=-1, keepdims=True)
        var2 = jnp.mean((z - mu2) ** 2, axis=-1, keepdims=True)
        o_ref[...] = ((z - mu2) * jax.lax.rsqrt(var2 + LN_EPS)
                      * g2_ref[...] + bln2_ref[...]).astype(o_ref.dtype)


# ---------------------------------------------------------------------------
# pallas_call wrappers
# ---------------------------------------------------------------------------

def embed_pallas(seq2d, t2d, pos2d, w_sel, b_sel, w_time, b_time, bias_emb):
    N, D = seq2d.shape
    T0 = w_sel.shape[1]
    TM = _row_tile(N)
    row = lambda i: (i, 0)
    rep = lambda i: (0, 0)
    est = T0 * D * 4 + 2 * TM * (3 * D + T0 + 1) * 4
    return pl.pallas_call(
        _embed_kernel,
        out_shape=jax.ShapeDtypeStruct((N, D), jnp.float32),
        grid=(N // TM,),
        in_specs=[
            pl.BlockSpec((TM, D), row),
            pl.BlockSpec((TM, 1), row),
            pl.BlockSpec((TM, D), row),
            pl.BlockSpec((1, T0), rep),
            pl.BlockSpec((1, T0), rep),
            pl.BlockSpec((T0, D), rep),
            pl.BlockSpec((1, D), rep),
            pl.BlockSpec((1, D), rep),
        ],
        out_specs=pl.BlockSpec((TM, D), row),
        compiler_params=_vmem_params(("parallel",), est),
    )(seq2d, t2d, pos2d, w_sel, b_sel, w_time,
      b_time.reshape(1, -1), bias_emb.reshape(1, -1))


def qkv_pallas(x2d, wk, wv, wq, bk, bv, bq, scale):
    N, D = x2d.shape
    TM = _row_tile(N)
    row = lambda i: (i, 0)
    rep = lambda i: (0, 0)
    est = 3 * D * D * 2 + 3 * D * 4 + 2 * TM * D * 4 + 3 * 2 * TM * D * 2
    out_sd = jax.ShapeDtypeStruct((N, D), jnp.bfloat16)
    return pl.pallas_call(
        functools.partial(_qkv_kernel, scale=scale),
        out_shape=(out_sd, out_sd, out_sd),
        grid=(N // TM,),
        in_specs=[
            pl.BlockSpec((TM, D), row),
            pl.BlockSpec((D, D), rep), pl.BlockSpec((D, D), rep), pl.BlockSpec((D, D), rep),
            pl.BlockSpec((1, D), rep), pl.BlockSpec((1, D), rep), pl.BlockSpec((1, D), rep),
        ],
        out_specs=[pl.BlockSpec((TM, D), row),
                   pl.BlockSpec((TM, D), row),
                   pl.BlockSpec((TM, D), row)],
        compiler_params=_vmem_params(("parallel",), est),
    )(x2d, wk, wv, wq, bk.reshape(1, -1), bv.reshape(1, -1), bq.reshape(1, -1))


def attention_pallas(q3, k3, v3, key_bias):
    BH, S, d = q3.shape
    TQ = _seq_tile(S)
    est = 2 * (TQ * d * 2) * 2 + 2 * (S * d * 2) * 2 + 2 * S * 4 + 4 * TQ * S * 4
    return pl.pallas_call(
        _attn_kernel,
        out_shape=jax.ShapeDtypeStruct((BH, S, d), jnp.bfloat16),
        grid=(BH, S // TQ),
        in_specs=[
            pl.BlockSpec((None, TQ, d), lambda b, t: (b, t, 0)),   # q tile
            pl.BlockSpec((None, S, d), lambda b, t: (b, 0, 0)),    # full K for this row
            pl.BlockSpec((None, S, d), lambda b, t: (b, 0, 0)),    # full V for this row
            pl.BlockSpec((None, 1, S), lambda b, t: (b, 0, 0)),    # additive key-pad bias
        ],
        out_specs=pl.BlockSpec((None, TQ, d), lambda b, t: (b, t, 0)),
        compiler_params=_vmem_params(("parallel", "parallel"), est),
    )(q3, k3, v3, key_bias)


def post_attn_pallas(ctx2d, residual, wo, bo, g1, b1ln, w1, b1, w2, b2, g2, b2ln):
    N, D = residual.shape
    F = w1.shape[1]
    TM = _row_tile(N)
    TF = _ffn_tile(F)
    row = lambda i, f: (i, 0)
    rep = lambda i, f: (0, 0)
    est = (D * D * 2 + 2 * D * TF * 2 + 2 * TF * D * 2
           + 2 * TM * D * 2 + 4 * TM * D * 4 + 2 * TM * D * 4 + TM * TF * 4)
    return pl.pallas_call(
        _post_attn_kernel,
        out_shape=jax.ShapeDtypeStruct((N, D), jnp.float32),
        grid=(N // TM, F // TF),
        in_specs=[
            pl.BlockSpec((TM, D), row),                    # context (bf16)
            pl.BlockSpec((TM, D), row),                    # residual (f32)
            pl.BlockSpec((D, D), rep),                     # wo
            pl.BlockSpec((1, D), rep),                     # bo
            pl.BlockSpec((1, D), rep),                     # ln1 gamma
            pl.BlockSpec((1, D), rep),                     # ln1 beta
            pl.BlockSpec((D, TF), lambda i, f: (0, f)),    # w1 (K-tiled over F)
            pl.BlockSpec((1, TF), lambda i, f: (0, f)),    # b1
            pl.BlockSpec((TF, D), lambda i, f: (f, 0)),    # w2 (K-tiled over F)
            pl.BlockSpec((1, D), rep),                     # b2
            pl.BlockSpec((1, D), rep),                     # ln2 gamma
            pl.BlockSpec((1, D), rep),                     # ln2 beta
        ],
        out_specs=pl.BlockSpec((TM, D), row),
        scratch_shapes=[pltpu.VMEM((TM, D), jnp.float32),   # y  (post LN1)
                        pltpu.VMEM((TM, D), jnp.float32)],  # ff accumulator
        compiler_params=_vmem_params(("parallel", "arbitrary"), est),
    )(ctx2d, residual, wo, bo.reshape(1, -1), g1.reshape(1, -1), b1ln.reshape(1, -1),
      w1, b1.reshape(1, -1), w2, b2.reshape(1, -1), g2.reshape(1, -1), b2ln.reshape(1, -1))


# ---------------------------------------------------------------------------
# Parameter construction (deterministic, mirrors module __init__ shapes)
# ---------------------------------------------------------------------------

def make_pe_table(d_model, max_seq_len):
    pe = np.array(
        [[pos / np.power(10000, 2.0 * (j // 2) / d_model) for j in range(d_model)]
         for pos in range(max_seq_len)]
    )
    pe[:, 0::2] = np.sin(pe[:, 0::2])
    pe[:, 1::2] = np.cos(pe[:, 1::2])
    pe = np.concatenate([np.zeros((1, d_model)), pe], axis=0).astype(np.float32)
    return jnp.asarray(pe)                                # (max_seq_len + 1, d_model)


def init_linear(key, din, dout, wdtype=jnp.float32):
    k1, k2 = jax.random.split(key)
    bound = 1.0 / math.sqrt(din)
    w = jax.random.uniform(k1, (din, dout), jnp.float32, -bound, bound)
    b = jax.random.uniform(k2, (dout,), jnp.float32, -bound, bound)
    return w.astype(wdtype), b


def init_params(key, *, model_dim, num_heads, ffn_dim, num_layers,
                max_seq_len, move_num, time_sel):
    T0, T1 = time_sel
    assert T1 == model_dim
    keys = jax.random.split(key, 4 + num_layers)
    w_sel, b_sel = init_linear(keys[0], 1, T0)            # selection_layer: Linear(1, T0)
    w_time, b_time = init_linear(keys[1], T0, T1)         # time_layer: Linear(T0, T1)
    bound = 1.0 / math.sqrt(move_num)
    bias_emb = jax.random.uniform(keys[2], (model_dim,), jnp.float32, -bound, bound)

    layers = []
    for li in range(num_layers):
        lk = jax.random.split(keys[4 + li], 7)
        wk, bk = init_linear(lk[0], model_dim, model_dim, jnp.bfloat16)
        wv, bv = init_linear(lk[1], model_dim, model_dim, jnp.bfloat16)
        wq, bq = init_linear(lk[2], model_dim, model_dim, jnp.bfloat16)
        wo, bo = init_linear(lk[3], model_dim, model_dim, jnp.bfloat16)
        w1, b1 = init_linear(lk[4], model_dim, ffn_dim, jnp.bfloat16)   # Conv1d(D, F, 1)
        w2, b2 = init_linear(lk[5], ffn_dim, model_dim, jnp.bfloat16)   # Conv1d(F, D, 1)
        layers.append(dict(
            wk=wk, bk=bk, wv=wv, bv=bv, wq=wq, bq=bq,
            wo=wo, bo=bo,
            ln1_g=jnp.ones((model_dim,), jnp.float32),
            ln1_b=jnp.zeros((model_dim,), jnp.float32),
            w1=w1, b1=b1, w2=w2, b2=b2,
            ln2_g=jnp.ones((model_dim,), jnp.float32),
            ln2_b=jnp.zeros((model_dim,), jnp.float32),
        ))

    return dict(
        w_sel=w_sel.reshape(1, T0), b_sel=b_sel.reshape(1, T0),
        w_time=w_time, b_time=b_time,
        bias_emb=bias_emb,
        pe_table=make_pe_table(model_dim, max_seq_len),
        num_heads=num_heads,
        layers=layers,
    )


# ---------------------------------------------------------------------------
# EncoderNew.forward
# ---------------------------------------------------------------------------

def encoder_new_forward(params, sequence_embedding, seq_time_step, lengths):
    B, S, D = sequence_embedding.shape
    H = params["num_heads"]
    d = D // H
    # scale exactly as in the module: (key.size(-1) // num_heads) ** (-0.5)
    scale = float((d // H) ** (-0.5))

    # positional indices: pos[b, i] = i + 1 for i < lengths[b] else 0
    ar = jnp.arange(S)
    pos_idx = jnp.where(ar[None, :] < lengths[:, None], ar[None, :] + 1, 0)   # (B, S)
    # TODO(synk): PE-table gather stays in XLA (a per-row in-kernel gather would force
    # a 1-row grid); the table lookup itself is tiny relative to the layer stack.
    output_pos = params["pe_table"][pos_idx]                                  # (B, S, D)

    # key-padding mask (seq_k == 0); the module repeats it num_heads times along the
    # batch dim, so raw-view row i gets the mask of batch (i % B).  Precomputed as an
    # additive bias (0 / -1e30) so the kernel only adds (no compare+select per score).
    key_pad = (pos_idx == 0)                                                  # (B, S)
    key_bias = jnp.where(jnp.tile(key_pad, (H, 1)), NEG_INF, 0.0)
    key_bias = key_bias.astype(jnp.float32).reshape(B * H, 1, S)

    N = B * S
    output = embed_pallas(
        sequence_embedding.reshape(N, D),
        seq_time_step.reshape(N, 1),
        output_pos.reshape(N, D),
        params["w_sel"], params["b_sel"],
        params["w_time"], params["b_time"],
        params["bias_emb"],
    )                                                                          # (N, D) f32

    for layer in params["layers"]:
        residual = output
        k2d, v2d, q2d = qkv_pallas(output, layer["wk"], layer["wv"], layer["wq"],
                                   layer["bk"], layer["bv"], layer["bq"], scale)
        # module uses raw contiguous views (B, S, H*d) -> (B*H, S, d); these reshapes
        # are pure reinterpretations of the contiguous (N, D) buffers (no copies)
        k3 = k2d.reshape(B * H, S, d)
        v3 = v2d.reshape(B * H, S, d)
        q3 = q2d.reshape(B * H, S, d)
        context = attention_pallas(q3, k3, v3, key_bias)                       # (B*H, S, d)
        output = post_attn_pallas(
            context.reshape(N, D), residual,
            layer["wo"], layer["bo"], layer["ln1_g"], layer["ln1_b"],
            layer["w1"], layer["b1"], layer["w2"], layer["b2"],
            layer["ln2_g"], layer["ln2_b"],
        )

    return output.reshape(B, S, D)


# ---------------------------------------------------------------------------
# main
# ---------------------------------------------------------------------------

if __name__ == "__main__":
    # small config consistent with the module
    B, S, D = 2, 8, 32          # batch, max_seq_len, hita_input_size
    H, FFN, L = 4, 64, 2        # heads, ffn size, encoder layers
    T_SEL = (16, 32)            # hita_time_selection_layer_encoder
    MOVE_NUM = 10

    root = jax.random.PRNGKey(0)
    kp, k1, k2 = jax.random.split(root, 3)

    params = init_params(
        kp, model_dim=D, num_heads=H, ffn_dim=FFN, num_layers=L,
        max_seq_len=S, move_num=MOVE_NUM, time_sel=T_SEL,
    )

    sequence_embedding = jax.random.normal(k1, (B, S, D), jnp.float32)
    seq_time_step = jax.random.uniform(k2, (B, S, 1), jnp.float32, 0.0, 10.0)
    lengths = jnp.array([8, 5], dtype=jnp.int32)      # valid lengths per batch element
    # TODO(synk): mask_mult is an unused argument of EncoderNew.forward; omitted.

    fwd = jax.jit(functools.partial(encoder_new_forward, params))
    out = fwd(sequence_embedding, seq_time_step, lengths)
    out = jax.block_until_ready(out)
    assert out.shape == (B, S, D)
    assert bool(jnp.all(jnp.isfinite(out)))
    print("KERNEL_OK")
</pallas_src>

<mosaic_0001>
module attributes {stable_mosaic.version = 11 : i64} {
  func.func @_qkv_kernel(%arg0: i32, %arg1: memref<16x32xf32, #tpu.memory_space<vmem>>, %arg2: memref<32x32xbf16, #tpu.memory_space<vmem>>, %arg3: memref<32x32xbf16, #tpu.memory_space<vmem>>, %arg4: memref<32x32xbf16, #tpu.memory_space<vmem>>, %arg5: memref<1x32xf32, #tpu.memory_space<vmem>>, %arg6: memref<1x32xf32, #tpu.memory_space<vmem>>, %arg7: memref<1x32xf32, #tpu.memory_space<vmem>>, %arg8: memref<16x32xbf16, #tpu.memory_space<vmem>>, %arg9: memref<16x32xbf16, #tpu.memory_space<vmem>>, %arg10: memref<16x32xbf16, #tpu.memory_space<vmem>>) attributes {dimension_semantics = [#tpu.dimension_semantics<parallel>], iteration_bounds = array<i64: 1>, scalar_prefetch = 0 : i64, scratch_operands = 0 : i64, tpu.core_type = #tpu.core_type<tc>, window_params = [{transform_indices = @transform_0, window_bounds = array<i64: 16, 32>}, {pipeline_mode = #tpu.pipeline_mode<synchronous>, transform_indices = @transform_1, window_bounds = array<i64: 32, 32>}, {pipeline_mode = #tpu.pipeline_mode<synchronous>, transform_indices = @transform_2, window_bounds = array<i64: 32, 32>}, {pipeline_mode = #tpu.pipeline_mode<synchronous>, transform_indices = @transform_3, window_bounds = array<i64: 32, 32>}, {pipeline_mode = #tpu.pipeline_mode<synchronous>, transform_indices = @transform_4, window_bounds = array<i64: 1, 32>}, {pipeline_mode = #tpu.pipeline_mode<synchronous>, transform_indices = @transform_5, window_bounds = array<i64: 1, 32>}, {pipeline_mode = #tpu.pipeline_mode<synchronous>, transform_indices = @transform_6, window_bounds = array<i64: 1, 32>}, {transform_indices = @transform_7, window_bounds = array<i64: 16, 32>}, {transform_indices = @transform_8, window_bounds = array<i64: 16, 32>}, {transform_indices = @transform_9, window_bounds = array<i64: 16, 32>}]} {
    %c0 = arith.constant 0 : index
    %c0_0 = arith.constant 0 : index
    %0 = vector.load %arg1[%c0, %c0_0] : memref<16x32xf32, #tpu.memory_space<vmem>>, vector<16x32xf32>
    %1 = arith.truncf %0 : vector<16x32xf32> to vector<16x32xbf16>
    %c0_1 = arith.constant 0 : index
    %c0_2 = arith.constant 0 : index
    %2 = vector.load %arg2[%c0_1, %c0_2] : memref<32x32xbf16, #tpu.memory_space<vmem>>, vector<32x32xbf16>
    %cst = arith.constant dense<0.000000e+00> : vector<16x32xf32>
    %3 = tpu.matmul %1, %2, %cst {dimension_numbers = #tpu.dot_dimension_numbers<[1], [0], [0], [1], [0, 0, 1, 1], [], []>} : vector<16x32xbf16>, vector<32x32xbf16>, vector<16x32xf32> -> vector<16x32xf32>
    %c0_3 = arith.constant 0 : index
    %c0_4 = arith.constant 0 : index
    %4 = vector.load %arg5[%c0_3, %c0_4] : memref<1x32xf32, #tpu.memory_space<vmem>>, vector<1x32xf32>
    %5 = vector.broadcast %4 : vector<1x32xf32> to vector<16x32xf32>
    %6 = arith.addf %3, %5 : vector<16x32xf32>
    %c0_5 = arith.constant 0 : index
    %c0_6 = arith.constant 0 : index
    %7 = vector.load %arg3[%c0_5, %c0_6] : memref<32x32xbf16, #tpu.memory_space<vmem>>, vector<32x32xbf16>
    %cst_7 = arith.constant dense<0.000000e+00> : vector<16x32xf32>
    %8 = tpu.matmul %1, %7, %cst_7 {dimension_numbers = #tpu.dot_dimension_numbers<[1], [0], [0], [1], [0, 0, 1, 1], [], []>} : vector<16x32xbf16>, vector<32x32xbf16>, vector<16x32xf32> -> vector<16x32xf32>
    %c0_8 = arith.constant 0 : index
    %c0_9 = arith.constant 0 : index
    %9 = vector.load %arg6[%c0_8, %c0_9] : memref<1x32xf32, #tpu.memory_space<vmem>>, vector<1x32xf32>
    %10 = vector.broadcast %9 : vector<1x32xf32> to vector<16x32xf32>
    %11 = arith.addf %8, %10 : vector<16x32xf32>
    %c0_10 = arith.constant 0 : index
    %c0_11 = arith.constant 0 : index
    %12 = vector.load %arg4[%c0_10, %c0_11] : memref<32x32xbf16, #tpu.memory_space<vmem>>, vector<32x32xbf16>
    %cst_12 = arith.constant dense<0.000000e+00> : vector<16x32xf32>
    %13 = tpu.matmul %1, %12, %cst_12 {dimension_numbers = #tpu.dot_dimension_numbers<[1], [0], [0], [1], [0, 0, 1, 1], [], []>} : vector<16x32xbf16>, vector<32x32xbf16>, vector<16x32xf32> -> vector<16x32xf32>
    %c0_13 = arith.constant 0 : index
    %c0_14 = arith.constant 0 : index
    %14 = vector.load %arg7[%c0_13, %c0_14] : memref<1x32xf32, #tpu.memory_space<vmem>>, vector<1x32xf32>
    %15 = vector.broadcast %14 : vector<1x32xf32> to vector<16x32xf32>
    %16 = arith.addf %13, %15 : vector<16x32xf32>
    %17 = arith.truncf %6 : vector<16x32xf32> to vector<16x32xbf16>
    %c0_15 = arith.constant 0 : index
    %c0_16 = arith.constant 0 : index
    %18 = vector.load %arg8[%c0_15, %c0_16] : memref<16x32xbf16, #tpu.memory_space<vmem>>, vector<16x32xbf16>
    tpu.vector_store %arg8[%c0_15, %c0_16], %17 {strides = array<i32>} : memref<16x32xbf16, #tpu.memory_space<vmem>>, vector<16x32xbf16>,
    %19 = arith.truncf %11 : vector<16x32xf32> to vector<16x32xbf16>
    %c0_17 = arith.constant 0 : index
    %c0_18 = arith.constant 0 : index
    %20 = vector.load %arg9[%c0_17, %c0_18] : memref<16x32xbf16, #tpu.memory_space<vmem>>, vector<16x32xbf16>
    tpu.vector_store %arg9[%c0_17, %c0_18], %19 {strides = array<i32>} : memref<16x32xbf16, #tpu.memory_space<vmem>>, vector<16x32xbf16>,
    %cst_19 = arith.constant 0.707106769 : f32
    %21 = vector.broadcast %cst_19 : f32 to vector<16x32xf32>
    %22 = arith.mulf %16, %21 : vector<16x32xf32>
    %23 = arith.truncf %22 : vector<16x32xf32> to vector<16x32xbf16>
    %c0_20 = arith.constant 0 : index
    %c0_21 = arith.constant 0 : index
    %24 = vector.load %arg10[%c0_20, %c0_21] : memref<16x32xbf16, #tpu.memory_space<vmem>>, vector<16x32xbf16>
    tpu.vector_store %arg10[%c0_20, %c0_21], %23 {strides = array<i32>} : memref<16x32xbf16, #tpu.memory_space<vmem>>, vector<16x32xbf16>,
    return
  }
  func.func @transform_0(%arg0: i32) -> (i32, i32) {
    %c0_i32 = arith.constant 0 : i32
    %c0_i32_0 = arith.constant 0 : i32
    return %arg0, %c0_i32 : i32, i32
  }
  func.func @transform_1(%arg0: i32) -> (i32, i32) {
    %c0_i32 = arith.constant 0 : i32
    %c0_i32_0 = arith.constant 0 : i32
    %c0_i32_1 = arith.constant 0 : i32
    return %c0_i32, %c0_i32_0 : i32, i32
  }
  func.func @transform_2(%arg0: i32) -> (i32, i32) {
    %c0_i32 = arith.constant 0 : i32
    %c0_i32_0 = arith.constant 0 : i32
    %c0_i32_1 = arith.constant 0 : i32
    return %c0_i32, %c0_i32_0 : i32, i32
  }
  func.func @transform_3(%arg0: i32) -> (i32, i32) {
    %c0_i32 = arith.constant 0 : i32
    %c0_i32_0 = arith.constant 0 : i32
    %c0_i32_1 = arith.constant 0 : i32
    return %c0_i32, %c0_i32_0 : i32, i32
  }
  func.func @transform_4(%arg0: i32) -> (i32, i32) {
    %c0_i32 = arith.constant 0 : i32
    %c0_i32_0 = arith.constant 0 : i32
    %c0_i32_1 = arith.constant 0 : i32
    return %c0_i32, %c0_i32_0 : i32, i32
  }
  func.func @transform_5(%arg0: i32) -> (i32, i32) {
    %c0_i32 = arith.constant 0 : i32
    %c0_i32_0 = arith.constant 0 : i32
    %c0_i32_1 = arith.constant 0 : i32
    return %c0_i32, %c0_i32_0 : i32, i32
  }
  func.func @transform_6(%arg0: i32) -> (i32, i32) {
    %c0_i32 = arith.constant 0 : i32
    %c0_i32_0 = arith.constant 0 : i32
    %c0_i32_1 = arith.constant 0 : i32
    return %c0_i32, %c0_i32_0 : i32, i32
  }
  func.func @transform_7(%arg0: i32) -> (i32, i32) {
    %c0_i32 = arith.constant 0 : i32
    %c0_i32_0 = arith.constant 0 : i32
    return %arg0, %c0_i32 : i32, i32
  }
  func.func @transform_8(%arg0: i32) -> (i32, i32) {
    %c0_i32 = arith.constant 0 : i32
    %c0_i32_0 = arith.constant 0 : i32
    return %arg0, %c0_i32 : i32, i32
  }
  func.func @transform_9(%arg0: i32) -> (i32, i32) {
    %c0_i32 = arith.constant 0 : i32
    %c0_i32_0 = arith.constant 0 : i32
    return %arg0, %c0_i32 : i32, i32
  }
}

module attributes {stable_mosaic.version = 11 : i64} {
  func.func @_embed_kernel(%arg0: i32, %arg1: memref<16x32xf32, #tpu.memory_space<vmem>>, %arg2: memref<16x1xf32, #tpu.memory_space<vmem>>, %arg3: memref<16x32xf32, #tpu.memory_space<vmem>>, %arg4: memref<1x16xf32, #tpu.memory_space<vmem>>, %arg5: memref<1x16xf32, #tpu.memory_space<vmem>>, %arg6: memref<16x32xf32, #tpu.memory_space<vmem>>, %arg7: memref<1x32xf32, #tpu.memory_space<vmem>>, %arg8: memref<1x32xf32, #tpu.memory_space<vmem>>, %arg9: memref<16x32xf32, #tpu.memory_space<vmem>>) attributes {dimension_semantics = [#tpu.dimension_semantics<parallel>], iteration_bounds = array<i64: 1>, scalar_prefetch = 0 : i64, scratch_operands = 0 : i64, tpu.core_type = #tpu.core_type<tc>, window_params = [{transform_indices = @transform_0, window_bounds = array<i64: 16, 32>}, {transform_indices = @transform_1, window_bounds = array<i64: 16, 1>}, {transform_indices = @transform_2, window_bounds = array<i64: 16, 32>}, {pipeline_mode = #tpu.pipeline_mode<synchronous>, transform_indices = @transform_3, window_bounds = array<i64: 1, 16>}, {pipeline_mode = #tpu.pipeline_mode<synchronous>, transform_indices = @transform_4, window_bounds = array<i64: 1, 16>}, {pipeline_mode = #tpu.pipeline_mode<synchronous>, transform_indices = @transform_5, window_bounds = array<i64: 16, 32>}, {pipeline_mode = #tpu.pipeline_mode<synchronous>, transform_indices = @transform_6, window_bounds = array<i64: 1, 32>}, {pipeline_mode = #tpu.pipeline_mode<synchronous>, transform_indices = @transform_7, window_bounds = array<i64: 1, 32>}, {transform_indices = @transform_8, window_bounds = array<i64: 16, 32>}]} {
    %c0 = arith.constant 0 : index
    %c0_0 = arith.constant 0 : index
    %0 = vector.load %arg2[%c0, %c0_0] : memref<16x1xf32, #tpu.memory_space<vmem>>, vector<16x1xf32>
    %c0_1 = arith.constant 0 : index
    %c0_2 = arith.constant 0 : index
    %1 = vector.load %arg4[%c0_1, %c0_2] : memref<1x16xf32, #tpu.memory_space<vmem>>, vector<1x16xf32>
    %2 = vector.broadcast %0 : vector<16x1xf32> to vector<16x16xf32>
    %3 = vector.broadcast %1 : vector<1x16xf32> to vector<16x16xf32>
    %4 = arith.mulf %2, %3 : vector<16x16xf32>
    %c0_3 = arith.constant 0 : index
    %c0_4 = arith.constant 0 : index
    %5 = vector.load %arg5[%c0_3, %c0_4] : memref<1x16xf32, #tpu.memory_space<vmem>>, vector<1x16xf32>
    %6 = vector.broadcast %5 : vector<1x16xf32> to vector<16x16xf32>
    %7 = arith.addf %4, %6 : vector<16x16xf32>
    %8 = arith.mulf %7, %7 : vector<16x16xf32>
    %9 = math.tanh %8 : vector<16x16xf32>
    %cst = arith.constant 1.000000e+00 : f32
    %10 = vector.broadcast %cst : f32 to vector<16x16xf32>
    %11 = arith.subf %10, %9 : vector<16x16xf32>
    %c0_5 = arith.constant 0 : index
    %c0_6 = arith.constant 0 : index
    %12 = vector.load %arg6[%c0_5, %c0_6] : memref<16x32xf32, #tpu.memory_space<vmem>>, vector<16x32xf32>
    %cst_7 = arith.constant dense<0.000000e+00> : vector<16x32xf32>
    %13 = tpu.matmul %11, %12, %cst_7 {dimension_numbers = #tpu.dot_dimension_numbers<[1], [0], [0], [1], [0, 0, 1, 1], [], []>} : vector<16x16xf32>, vector<16x32xf32>, vector<16x32xf32> -> vector<16x32xf32>
    %c0_8 = arith.constant 0 : index
    %c0_9 = arith.constant 0 : index
    %14 = vector.load %arg7[%c0_8, %c0_9] : memref<1x32xf32, #tpu.memory_space<vmem>>, vector<1x32xf32>
    %15 = vector.broadcast %14 : vector<1x32xf32> to vector<16x32xf32>
    %16 = arith.addf %13, %15 : vector<16x32xf32>
    %c0_10 = arith.constant 0 : index
    %c0_11 = arith.constant 0 : index
    %17 = vector.load %arg1[%c0_10, %c0_11] : memref<16x32xf32, #tpu.memory_space<vmem>>, vector<16x32xf32>
    %c0_12 = arith.constant 0 : index
    %c0_13 = arith.constant 0 : index
    %18 = vector.load %arg8[%c0_12, %c0_13] : memref<1x32xf32, #tpu.memory_space<vmem>>, vector<1x32xf32>
    %19 = vector.broadcast %18 : vector<1x32xf32> to vector<16x32xf32>
    %20 = arith.addf %17, %19 : vector<16x32xf32>
    %21 = arith.addf %20, %16 : vector<16x32xf32>
    %c0_14 = arith.constant 0 : index
    %c0_15 = arith.constant 0 : index
    %22 = vector.load %arg3[%c0_14, %c0_15] : memref<16x32xf32, #tpu.memory_space<vmem>>, vector<16x32xf32>
    %23 = arith.addf %21, %22 : vector<16x32xf32>
    %c0_16 = arith.constant 0 : index
    %c0_17 = arith.constant 0 : index
    %24 = vector.load %arg9[%c0_16, %c0_17] : memref<16x32xf32, #tpu.memory_space<vmem>>, vector<16x32xf32>
    tpu.vector_store %arg9[%c0_16, %c0_17], %23 {strides = array<i32>} : memref<16x32xf32, #tpu.memory_space<vmem>>, vector<16x32xf32>,
    return
  }
  func.func @transform_0(%arg0: i32) -> (i32, i32) {
    %c0_i32 = arith.constant 0 : i32
    %c0_i32_0 = arith.constant 0 : i32
    return %arg0, %c0_i32 : i32, i32
  }
  func.func @transform_1(%arg0: i32) -> (i32, i32) {
    %c0_i32 = arith.constant 0 : i32
    %c0_i32_0 = arith.constant 0 : i32
    return %arg0, %c0_i32 : i32, i32
  }
  func.func @transform_2(%arg0: i32) -> (i32, i32) {
    %c0_i32 = arith.constant 0 : i32
    %c0_i32_0 = arith.constant 0 : i32
    return %arg0, %c0_i32 : i32, i32
  }
  func.func @transform_3(%arg0: i32) -> (i32, i32) {
    %c0_i32 = arith.constant 0 : i32
    %c0_i32_0 = arith.constant 0 : i32
    %c0_i32_1 = arith.constant 0 : i32
    return %c0_i32, %c0_i32_0 : i32, i32
  }
  func.func @transform_4(%arg0: i32) -> (i32, i32) {
    %c0_i32 = arith.constant 0 : i32
    %c0_i32_0 = arith.constant 0 : i32
    %c0_i32_1 = arith.constant 0 : i32
    return %c0_i32, %c0_i32_0 : i32, i32
  }
  func.func @transform_5(%arg0: i32) -> (i32, i32) {
    %c0_i32 = arith.constant 0 : i32
    %c0_i32_0 = arith.constant 0 : i32
    %c0_i32_1 = arith.constant 0 : i32
    return %c0_i32, %c0_i32_0 : i32, i32
  }
  func.func @transform_6(%arg0: i32) -> (i32, i32) {
    %c0_i32 = arith.constant 0 : i32
    %c0_i32_0 = arith.constant 0 : i32
    %c0_i32_1 = arith.constant 0 : i32
    return %c0_i32, %c0_i32_0 : i32, i32
  }
  func.func @transform_7(%arg0: i32) -> (i32, i32) {
    %c0_i32 = arith.constant 0 : i32
    %c0_i32_0 = arith.constant 0 : i32
    %c0_i32_1 = arith.constant 0 : i32
    return %c0_i32, %c0_i32_0 : i32, i32
  }
  func.func @transform_8(%arg0: i32) -> (i32, i32) {
    %c0_i32 = arith.constant 0 : i32
    %c0_i32_0 = arith.constant 0 : i32
    return %arg0, %c0_i32 : i32, i32
  }
}

module attributes {stable_mosaic.version = 11 : i64} {
  func.func @_attn_kernel(%arg0: i32, %arg1: i32, %arg2: memref<1x8x8xbf16, #tpu.memory_space<vmem>>, %arg3: memref<1x8x8xbf16, #tpu.memory_space<vmem>>, %arg4: memref<1x8x8xbf16, #tpu.memory_space<vmem>>, %arg5: memref<1x1x8xf32, #tpu.memory_space<vmem>>, %arg6: memref<1x8x8xbf16, #tpu.memory_space<vmem>>) attributes {dimension_semantics = [#tpu.dimension_semantics<parallel>, #tpu.dimension_semantics<parallel>], iteration_bounds = array<i64: 8, 1>, scalar_prefetch = 0 : i64, scratch_operands = 0 : i64, tpu.core_type = #tpu.core_type<tc>, window_params = [{transform_indices = @transform_0, window_bounds = array<i64: 1, 8, 8>}, {transform_indices = @transform_1, window_bounds = array<i64: 1, 8, 8>}, {transform_indices = @transform_2, window_bounds = array<i64: 1, 8, 8>}, {transform_indices = @transform_3, window_bounds = array<i64: 1, 1, 8>}, {transform_indices = @transform_4, window_bounds = array<i64: 1, 8, 8>}]} {
    %c0 = arith.constant 0 : index
    %c0_0 = arith.constant 0 : index
    %c0_1 = arith.constant 0 : index
    %0 = vector.load %arg2[%c0, %c0_0, %c0_1] : memref<1x8x8xbf16, #tpu.memory_space<vmem>>, vector<1x8x8xbf16>
    %1 = vector.shape_cast %0 : vector<1x8x8xbf16> to vector<8x8xbf16>
    %c0_2 = arith.constant 0 : index
    %c0_3 = arith.constant 0 : index
    %c0_4 = arith.constant 0 : index
    %2 = vector.load %arg3[%c0_2, %c0_3, %c0_4] : memref<1x8x8xbf16, #tpu.memory_space<vmem>>, vector<1x8x8xbf16>
    %3 = vector.shape_cast %2 : vector<1x8x8xbf16> to vector<8x8xbf16>
    %c0_5 = arith.constant 0 : index
    %c0_6 = arith.constant 0 : index
    %c0_7 = arith.constant 0 : index
    %4 = vector.load %arg4[%c0_5, %c0_6, %c0_7] : memref<1x8x8xbf16, #tpu.memory_space<vmem>>, vector<1x8x8xbf16>
    %5 = vector.shape_cast %4 : vector<1x8x8xbf16> to vector<8x8xbf16>
    %cst = arith.constant dense<0.000000e+00> : vector<8x8xf32>
    %6 = tpu.matmul %1, %3, %cst {dimension_numbers = #tpu.dot_dimension_numbers<[1], [1], [0], [0], [0, 0, 1, 0], [], []>} : vector<8x8xbf16>, vector<8x8xbf16>, vector<8x8xf32> -> vector<8x8xf32>
    %c0_8 = arith.constant 0 : index
    %c0_9 = arith.constant 0 : index
    %c0_10 = arith.constant 0 : index
    %7 = vector.load %arg5[%c0_8, %c0_9, %c0_10] : memref<1x1x8xf32, #tpu.memory_space<vmem>>, vector<1x1x8xf32>
    %8 = vector.shape_cast %7 : vector<1x1x8xf32> to vector<1x8xf32>
    %9 = vector.broadcast %8 : vector<1x8xf32> to vector<8x8xf32>
    %10 = arith.addf %6, %9 : vector<8x8xf32>
    %cst_11 = arith.constant dense<0xFF800000> : vector<8xf32>
    %11 = vector.multi_reduction <maximumf>, %10, %cst_11 [1] : vector<8x8xf32> to vector<8xf32>
    %12 = vector.shape_cast %11 : vector<8xf32> to vector<8x1xf32>
    %13 = vector.broadcast %12 : vector<8x1xf32> to vector<8x8xf32>
    %14 = arith.subf %10, %13 : vector<8x8xf32>
    %15 = math.exp %14 : vector<8x8xf32>
    %cst_12 = arith.constant dense<0.000000e+00> : vector<8xf32>
    %16 = vector.multi_reduction <add>, %15, %cst_12 [1] : vector<8x8xf32> to vector<8xf32>
    %17 = vector.shape_cast %16 : vector<8xf32> to vector<8x1xf32>
    %18 = vector.broadcast %17 : vector<8x1xf32> to vector<8x8xf32>
    %19 = arith.divf %15, %18 : vector<8x8xf32>
    %20 = arith.truncf %19 : vector<8x8xf32> to vector<8x8xbf16>
    %cst_13 = arith.constant dense<0.000000e+00> : vector<8x8xf32>
    %21 = tpu.matmul %20, %5, %cst_13 {dimension_numbers = #tpu.dot_dimension_numbers<[1], [0], [0], [1], [0, 0, 1, 1], [], []>} : vector<8x8xbf16>, vector<8x8xbf16>, vector<8x8xf32> -> vector<8x8xf32>
    %22 = arith.truncf %21 : vector<8x8xf32> to vector<8x8xbf16>
    %c0_14 = arith.constant 0 : index
    %c0_15 = arith.constant 0 : index
    %c0_16 = arith.constant 0 : index
    %23 = vector.load %arg6[%c0_14, %c0_15, %c0_16] : memref<1x8x8xbf16, #tpu.memory_space<vmem>>, vector<1x8x8xbf16>
    %24 = vector.shape_cast %23 : vector<1x8x8xbf16> to vector<8x8xbf16>
    %25 = vector.shape_cast %22 : vector<8x8xbf16> to vector<1x8x8xbf16>
    tpu.vector_store %arg6[%c0_14, %c0_15, %c0_16], %25 {strides = array<i32>} : memref<1x8x8xbf16, #tpu.memory_space<vmem>>, vector<1x8x8xbf16>,
    return
  }
  func.func @transform_0(%arg0: i32, %arg1: i32) -> (i32, i32, i32) {
    %c0_i32 = arith.constant 0 : i32
    %c0_i32_0 = arith.constant 0 : i32
    return %arg0, %arg1, %c0_i32 : i32, i32, i32
  }
  func.func @transform_1(%arg0: i32, %arg1: i32) -> (i32, i32, i32) {
    %c0_i32 = arith.constant 0 : i32
    %c0_i32_0 = arith.constant 0 : i32
    %c0_i32_1 = arith.constant 0 : i32
    return %arg0, %c0_i32, %c0_i32_0 : i32, i32, i32
  }
  func.func @transform_2(%arg0: i32, %arg1: i32) -> (i32, i32, i32) {
    %c0_i32 = arith.constant 0 : i32
    %c0_i32_0 = arith.constant 0 : i32
    %c0_i32_1 = arith.constant 0 : i32
    return %arg0, %c0_i32, %c0_i32_0 : i32, i32, i32
  }
  func.func @transform_3(%arg0: i32, %arg1: i32) -> (i32, i32, i32) {
    %c0_i32 = arith.constant 0 : i32
    %c0_i32_0 = arith.constant 0 : i32
    %c0_i32_1 = arith.constant 0 : i32
    return %arg0, %c0_i32, %c0_i32_0 : i32, i32, i32
  }
  func.func @transform_4(%arg0: i32, %arg1: i32) -> (i32, i32, i32) {
    %c0_i32 = arith.constant 0 : i32
    %c0_i32_0 = arith.constant 0 : i32
    return %arg0, %arg1, %c0_i32 : i32, i32, i32
  }
}

module attributes {stable_mosaic.version = 11 : i64} {
  func.func @_post_attn_kernel(%arg0: i32, %arg1: i32, %arg2: memref<16x32xbf16, #tpu.memory_space<vmem>>, %arg3: memref<16x32xf32, #tpu.memory_space<vmem>>, %arg4: memref<32x32xbf16, #tpu.memory_space<vmem>>, %arg5: memref<1x32xf32, #tpu.memory_space<vmem>>, %arg6: memref<1x32xf32, #tpu.memory_space<vmem>>, %arg7: memref<1x32xf32, #tpu.memory_space<vmem>>, %arg8: memref<32x64xbf16, #tpu.memory_space<vmem>>, %arg9: memref<1x64xf32, #tpu.memory_space<vmem>>, %arg10: memref<64x32xbf16, #tpu.memory_space<vmem>>, %arg11: memref<1x32xf32, #tpu.memory_space<vmem>>, %arg12: memref<1x32xf32, #tpu.memory_space<vmem>>, %arg13: memref<1x32xf32, #tpu.memory_space<vmem>>, %arg14: memref<16x32xf32, #tpu.memory_space<vmem>>, %arg15: memref<16x32xf32, #tpu.memory_space<vmem>>, %arg16: memref<16x32xf32, #tpu.memory_space<vmem>>) attributes {dimension_semantics = [#tpu.dimension_semantics<parallel>, #tpu.dimension_semantics<arbitrary>], iteration_bounds = array<i64: 1, 1>, scalar_prefetch = 0 : i64, scratch_operands = 2 : i64, tpu.core_type = #tpu.core_type<tc>, window_params = [{transform_indices = @transform_0, window_bounds = array<i64: 16, 32>}, {transform_indices = @transform_1, window_bounds = array<i64: 16, 32>}, {pipeline_mode = #tpu.pipeline_mode<synchronous>, transform_indices = @transform_2, window_bounds = array<i64: 32, 32>}, {pipeline_mode = #tpu.pipeline_mode<synchronous>, transform_indices = @transform_3, window_bounds = array<i64: 1, 32>}, {pipeline_mode = #tpu.pipeline_mode<synchronous>, transform_indices = @transform_4, window_bounds = array<i64: 1, 32>}, {pipeline_mode = #tpu.pipeline_mode<synchronous>, transform_indices = @transform_5, window_bounds = array<i64: 1, 32>}, {transform_indices = @transform_6, window_bounds = array<i64: 32, 64>}, {transform_indices = @transform_7, window_bounds = array<i64: 1, 64>}, {transform_indices = @transform_8, window_bounds = array<i64: 64, 32>}, {pipeline_mode = #tpu.pipeline_mode<synchronous>, transform_indices = @transform_9, window_bounds = array<i64: 1, 32>}, {pipeline_mode = #tpu.pipeline_mode<synchronous>, transform_indices = @transform_10, window_bounds = array<i64: 1, 32>}, {pipeline_mode = #tpu.pipeline_mode<synchronous>, transform_indices = @transform_11, window_bounds = array<i64: 1, 32>}, {transform_indices = @transform_12, window_bounds = array<i64: 16, 32>}]} {
    %c0_i32 = arith.constant 0 : i32
    %0 = arith.cmpi eq, %arg1, %c0_i32 : i32
    %1 = arith.extui %0 : i1 to i32
    %c0_i32_0 = arith.constant 0 : i32
    %2 = arith.cmpi ne, %1, %c0_i32_0 : i32
    scf.if %2 {
      %c0_16 = arith.constant 0 : index
      %c0_17 = arith.constant 0 : index
      %21 = vector.load %arg2[%c0_16, %c0_17] : memref<16x32xbf16, #tpu.memory_space<vmem>>, vector<16x32xbf16>
      %c0_18 = arith.constant 0 : index
      %c0_19 = arith.constant 0 : index
      %22 = vector.load %arg4[%c0_18, %c0_19] : memref<32x32xbf16, #tpu.memory_space<vmem>>, vector<32x32xbf16>
      %cst_20 = arith.constant dense<0.000000e+00> : vector<16x32xf32>
      %23 = tpu.matmul %21, %22, %cst_20 {dimension_numbers = #tpu.dot_dimension_numbers<[1], [0], [0], [1], [0, 0, 1, 1], [], []>} : vector<16x32xbf16>, vector<32x32xbf16>, vector<16x32xf32> -> vector<16x32xf32>
      %c0_21 = arith.constant 0 : index
      %c0_22 = arith.constant 0 : index
      %24 = vector.load %arg5[%c0_21, %c0_22] : memref<1x32xf32, #tpu.memory_space<vmem>>, vector<1x32xf32>
      %25 = vector.broadcast %24 : vector<1x32xf32> to vector<16x32xf32>
      %26 = arith.addf %23, %25 : vector<16x32xf32>
      %c0_23 = arith.constant 0 : index
      %c0_24 = arith.constant 0 : index
      %27 = vector.load %arg3[%c0_23, %c0_24] : memref<16x32xf32, #tpu.memory_space<vmem>>, vector<16x32xf32>
      %28 = arith.addf %27, %26 : vector<16x32xf32>
      %cst_25 = arith.constant dense<0.000000e+00> : vector<16xf32>
      %29 = vector.multi_reduction <add>, %28, %cst_25 [1] : vector<16x32xf32> to vector<16xf32>
      %30 = vector.shape_cast %29 : vector<16xf32> to vector<16x1xf32>
      %cst_26 = arith.constant 3.200000e+01 : f32
      %31 = vector.broadcast %cst_26 : f32 to vector<16x1xf32>
      %32 = arith.divf %30, %31 : vector<16x1xf32>
      %33 = vector.broadcast %32 : vector<16x1xf32> to vector<16x32xf32>
      %34 = arith.subf %28, %33 : vector<16x32xf32>
      %35 = arith.mulf %34, %34 : vector<16x32xf32>
      %cst_27 = arith.constant dense<0.000000e+00> : vector<16xf32>
      %36 = vector.multi_reduction <add>, %35, %cst_27 [1] : vector<16x32xf32> to vector<16xf32>
      %37 = vector.shape_cast %36 : vector<16xf32> to vector<16x1xf32>
      %cst_28 = arith.constant 3.200000e+01 : f32
      %38 = vector.broadcast %cst_28 : f32 to vector<16x1xf32>
      %39 = arith.divf %37, %38 : vector<16x1xf32>
      %40 = vector.broadcast %32 : vector<16x1xf32> to vector<16x32xf32>
      %41 = arith.subf %28, %40 : vector<16x32xf32>
      %cst_29 = arith.constant 9.99999974E-6 : f32
      %42 = vector.broadcast %cst_29 : f32 to vector<16x1xf32>
      %43 = arith.addf %39, %42 : vector<16x1xf32>
      %44 = math.rsqrt %43 : vector<16x1xf32>
      %45 = vector.broadcast %44 : vector<16x1xf32> to vector<16x32xf32>
      %46 = arith.mulf %41, %45 : vector<16x32xf32>
      %c0_30 = arith.constant 0 : index
      %c0_31 = arith.constant 0 : index
      %47 = vector.load %arg6[%c0_30, %c0_31] : memref<1x32xf32, #tpu.memory_space<vmem>>, vector<1x32xf32>
      %48 = vector.broadcast %47 : vector<1x32xf32> to vector<16x32xf32>
      %49 = arith.mulf %46, %48 : vector<16x32xf32>
      %c0_32 = arith.constant 0 : index
      %c0_33 = arith.constant 0 : index
      %50 = vector.load %arg7[%c0_32, %c0_33] : memref<1x32xf32, #tpu.memory_space<vmem>>, vector<1x32xf32>
      %51 = vector.broadcast %50 : vector<1x32xf32> to vector<16x32xf32>
      %52 = arith.addf %49, %51 : vector<16x32xf32>
      %c0_34 = arith.constant 0 : index
      %c0_35 = arith.constant 0 : index
      %53 = vector.load %arg15[%c0_34, %c0_35] : memref<16x32xf32, #tpu.memory_space<vmem>>, vector<16x32xf32>
      tpu.vector_store %arg15[%c0_34, %c0_35], %52 {strides = array<i32>} : memref<16x32xf32, #tpu.memory_space<vmem>>, vector<16x32xf32>,
      %cst_36 = arith.constant 0.000000e+00 : f32
      %54 = vector.broadcast %cst_36 : f32 to vector<16x32xf32>
      %c0_37 = arith.constant 0 : index
      %c0_38 = arith.constant 0 : index
      %55 = vector.load %arg16[%c0_37, %c0_38] : memref<16x32xf32, #tpu.memory_space<vmem>>, vector<16x32xf32>
      tpu.vector_store %arg16[%c0_37, %c0_38], %54 {strides = array<i32>} : memref<16x32xf32, #tpu.memory_space<vmem>>, vector<16x32xf32>,
    } else {
    }
    %c0 = arith.constant 0 : index
    %c0_1 = arith.constant 0 : index
    %3 = vector.load %arg15[%c0, %c0_1] : memref<16x32xf32, #tpu.memory_space<vmem>>, vector<16x32xf32>
    %4 = arith.truncf %3 : vector<16x32xf32> to vector<16x32xbf16>
    %c0_2 = arith.constant 0 : index
    %c0_3 = arith.constant 0 : index
    %5 = vector.load %arg8[%c0_2, %c0_3] : memref<32x64xbf16, #tpu.memory_space<vmem>>, vector<32x64xbf16>
    %cst = arith.constant dense<0.000000e+00> : vector<16x64xf32>
    %6 = tpu.matmul %4, %5, %cst {dimension_numbers = #tpu.dot_dimension_numbers<[1], [0], [0], [1], [0, 0, 1, 1], [], []>} : vector<16x32xbf16>, vector<32x64xbf16>, vector<16x64xf32> -> vector<16x64xf32>
    %c0_4 = arith.constant 0 : index
    %c0_5 = arith.constant 0 : index
    %7 = vector.load %arg9[%c0_4, %c0_5] : memref<1x64xf32, #tpu.memory_space<vmem>>, vector<1x64xf32>
    %8 = vector.broadcast %7 : vector<1x64xf32> to vector<16x64xf32>
    %9 = arith.addf %6, %8 : vector<16x64xf32>
    %cst_6 = arith.constant 0.000000e+00 : f32
    %10 = vector.broadcast %cst_6 : f32 to vector<16x64xf32>
    %11 = arith.maximumf %9, %10 : vector<16x64xf32>
    %c0_7 = arith.constant 0 : index
    %c0_8 = arith.constant 0 : index
    %12 = vector.load %arg16[%c0_7, %c0_8] : memref<16x32xf32, #tpu.memory_space<vmem>>, vector<16x32xf32>
    %13 = arith.truncf %11 : vector<16x64xf32> to vector<16x64xbf16>
    %c0_9 = arith.constant 0 : index
    %c0_10 = arith.constant 0 : index
    %14 = vector.load %arg10[%c0_9, %c0_10] : memref<64x32xbf16, #tpu.memory_space<vmem>>, vector<64x32xbf16>
    %cst_11 = arith.constant dense<0.000000e+00> : vector<16x32xf32>
    %15 = tpu.matmul %13, %14, %cst_11 {dimension_numbers = #tpu.dot_dimension_numbers<[1], [0], [0], [1], [0, 0, 1, 1], [], []>} : vector<16x64xbf16>, vector<64x32xbf16>, vector<16x32xf32> -> vector<16x32xf32>
    %16 = arith.addf %12, %15 : vector<16x32xf32>
    %c0_12 = arith.constant 0 : index
    %c0_13 = arith.constant 0 : index
    %17 = vector.load %arg16[%c0_12, %c0_13] : memref<16x32xf32, #tpu.memory_space<vmem>>, vector<16x32xf32>
    tpu.vector_store %arg16[%c0_12, %c0_13], %16 {strides = array<i32>} : memref<16x32xf32, #tpu.memory_space<vmem>>, vector<16x32xf32>,
    %c0_i32_14 = arith.constant 0 : i32
    %18 = arith.cmpi eq, %arg1, %c0_i32_14 : i32
    %19 = arith.extui %18 : i1 to i32
    %c0_i32_15 = arith.constant 0 : i32
    %20 = arith.cmpi ne, %19, %c0_i32_15 : i32
    scf.if %20 {
      %c0_16 = arith.constant 0 : index
      %c0_17 = arith.constant 0 : index
      %21 = vector.load %arg15[%c0_16, %c0_17] : memref<16x32xf32, #tpu.memory_space<vmem>>, vector<16x32xf32>
      %c0_18 = arith.constant 0 : index
      %c0_19 = arith.constant 0 : index
      %22 = vector.load %arg16[%c0_18, %c0_19] : memref<16x32xf32, #tpu.memory_space<vmem>>, vector<16x32xf32>
      %23 = arith.addf %21, %22 : vector<16x32xf32>
      %c0_20 = arith.constant 0 : index
      %c0_21 = arith.constant 0 : index
      %24 = vector.load %arg11[%c0_20, %c0_21] : memref<1x32xf32, #tpu.memory_space<vmem>>, vector<1x32xf32>
      %25 = vector.broadcast %24 : vector<1x32xf32> to vector<16x32xf32>
      %26 = arith.addf %23, %25 : vector<16x32xf32>
      %cst_22 = arith.constant dense<0.000000e+00> : vector<16xf32>
      %27 = vector.multi_reduction <add>, %26, %cst_22 [1] : vector<16x32xf32> to vector<16xf32>
      %28 = vector.shape_cast %27 : vector<16xf32> to vector<16x1xf32>
      %cst_23 = arith.constant 3.200000e+01 : f32
      %29 = vector.broadcast %cst_23 : f32 to vector<16x1xf32>
      %30 = arith.divf %28, %29 : vector<16x1xf32>
      %31 = vector.broadcast %30 : vector<16x1xf32> to vector<16x32xf32>
      %32 = arith.subf %26, %31 : vector<16x32xf32>
      %33 = arith.mulf %32, %32 : vector<16x32xf32>
      %cst_24 = arith.constant dense<0.000000e+00> : vector<16xf32>
      %34 = vector.multi_reduction <add>, %33, %cst_24 [1] : vector<16x32xf32> to vector<16xf32>
      %35 = vector.shape_cast %34 : vector<16xf32> to vector<16x1xf32>
      %cst_25 = arith.constant 3.200000e+01 : f32
      %36 = vector.broadcast %cst_25 : f32 to vector<16x1xf32>
      %37 = arith.divf %35, %36 : vector<16x1xf32>
      %38 = vector.broadcast %30 : vector<16x1xf32> to vector<16x32xf32>
      %39 = arith.subf %26, %38 : vector<16x32xf32>
      %cst_26 = arith.constant 9.99999974E-6 : f32
      %40 = vector.broadcast %cst_26 : f32 to vector<16x1xf32>
      %41 = arith.addf %37, %40 : vector<16x1xf32>
      %42 = math.rsqrt %41 : vector<16x1xf32>
      %43 = vector.broadcast %42 : vector<16x1xf32> to vector<16x32xf32>
      %44 = arith.mulf %39, %43 : vector<16x32xf32>
      %c0_27 = arith.constant 0 : index
      %c0_28 = arith.constant 0 : index
      %45 = vector.load %arg12[%c0_27, %c0_28] : memref<1x32xf32, #tpu.memory_space<vmem>>, vector<1x32xf32>
      %46 = vector.broadcast %45 : vector<1x32xf32> to vector<16x32xf32>
      %47 = arith.mulf %44, %46 : vector<16x32xf32>
      %c0_29 = arith.constant 0 : index
      %c0_30 = arith.constant 0 : index
      %48 = vector.load %arg13[%c0_29, %c0_30] : memref<1x32xf32, #tpu.memory_space<vmem>>, vector<1x32xf32>
      %49 = vector.broadcast %48 : vector<1x32xf32> to vector<16x32xf32>
      %50 = arith.addf %47, %49 : vector<16x32xf32>
      %c0_31 = arith.constant 0 : index
      %c0_32 = arith.constant 0 : index
      %51 = vector.load %arg14[%c0_31, %c0_32] : memref<16x32xf32, #tpu.memory_space<vmem>>, vector<16x32xf32>
      tpu.vector_store %arg14[%c0_31, %c0_32], %50 {strides = array<i32>} : memref<16x32xf32, #tpu.memory_space<vmem>>, vector<16x32xf32>,
    } else {
    }
    return
  }
  func.func @transform_0(%arg0: i32, %arg1: i32) -> (i32, i32) {
    %c0_i32 = arith.constant 0 : i32
    %c0_i32_0 = arith.constant 0 : i32
    return %arg0, %c0_i32 : i32, i32
  }
  func.func @transform_1(%arg0: i32, %arg1: i32) -> (i32, i32) {
    %c0_i32 = arith.constant 0 : i32
    %c0_i32_0 = arith.constant 0 : i32
    return %arg0, %c0_i32 : i32, i32
  }
  func.func @transform_2(%arg0: i32, %arg1: i32) -> (i32, i32) {
    %c0_i32 = arith.constant 0 : i32
    %c0_i32_0 = arith.constant 0 : i32
    %c0_i32_1 = arith.constant 0 : i32
    return %c0_i32, %c0_i32_0 : i32, i32
  }
  func.func @transform_3(%arg0: i32, %arg1: i32) -> (i32, i32) {
    %c0_i32 = arith.constant 0 : i32
    %c0_i32_0 = arith.constant 0 : i32
    %c0_i32_1 = arith.constant 0 : i32
    return %c0_i32, %c0_i32_0 : i32, i32
  }
  func.func @transform_4(%arg0: i32, %arg1: i32) -> (i32, i32) {
    %c0_i32 = arith.constant 0 : i32
    %c0_i32_0 = arith.constant 0 : i32
    %c0_i32_1 = arith.constant 0 : i32
    return %c0_i32, %c0_i32_0 : i32, i32
  }
  func.func @transform_5(%arg0: i32, %arg1: i32) -> (i32, i32) {
    %c0_i32 = arith.constant 0 : i32
    %c0_i32_0 = arith.constant 0 : i32
    %c0_i32_1 = arith.constant 0 : i32
    return %c0_i32, %c0_i32_0 : i32, i32
  }
  func.func @transform_6(%arg0: i32, %arg1: i32) -> (i32, i32) {
    %c0_i32 = arith.constant 0 : i32
    %c0_i32_0 = arith.constant 0 : i32
    return %c0_i32, %arg1 : i32, i32
  }
  func.func @transform_7(%arg0: i32, %arg1: i32) -> (i32, i32) {
    %c0_i32 = arith.constant 0 : i32
    %c0_i32_0 = arith.constant 0 : i32
    return %c0_i32, %arg1 : i32, i32
  }
  func.func @transform_8(%arg0: i32, %arg1: i32) -> (i32, i32) {
    %c0_i32 = arith.constant 0 : i32
    %c0_i32_0 = arith.constant 0 : i32
    return %arg1, %c0_i32 : i32, i32
  }
  func.func @transform_9(%arg0: i32, %arg1: i32) -> (i32, i32) {
    %c0_i32 = arith.constant 0 : i32
    %c0_i32_0 = arith.constant 0 : i32
    %c0_i32_1 = arith.constant 0 : i32
    return %c0_i32, %c0_i32_0 : i32, i32
  }
  func.func @transform_10(%arg0: i32, %arg1: i32) -> (i32, i32) {
    %c0_i32 = arith.constant 0 : i32
    %c0_i32_0 = arith.constant 0 : i32
    %c0_i32_1 = arith.constant 0 : i32
    return %c0_i32, %c0_i32_0 : i32, i32
  }
  func.func @transform_11(%arg0: i32, %arg1: i32) -> (i32, i32) {
    %c0_i32 = arith.constant 0 : i32
    %c0_i32_0 = arith.constant 0 : i32
    %c0_i32_1 = arith.constant 0 : i32
    return %c0_i32, %c0_i32_0 : i32, i32
  }
  func.func @transform_12(%arg0: i32, %arg1: i32) -> (i32, i32) {
    %c0_i32 = arith.constant 0 : i32
    %c0_i32_0 = arith.constant 0 : i32
    return %arg0, %c0_i32 : i32, i32
  }
}

module attributes {stable_mosaic.version = 11 : i64} {
  func.func @_post_attn_kernel(%arg0: i32, %arg1: i32, %arg2: memref<16x32xbf16, #tpu.memory_space<vmem>>, %arg3: memref<16x32xf32, #tpu.memory_space<vmem>>, %arg4: memref<32x32xbf16, #tpu.memory_space<vmem>>, %arg5: memref<1x32xf32, #tpu.memory_space<vmem>>, %arg6: memref<1x32xf32, #tpu.memory_space<vmem>>, %arg7: memref<1x32xf32, #tpu.memory_space<vmem>>, %arg8: memref<32x64xbf16, #tpu.memory_space<vmem>>, %arg9: memref<1x64xf32, #tpu.memory_space<vmem>>, %arg10: memref<64x32xbf16, #tpu.memory_space<vmem>>, %arg11: memref<1x32xf32, #tpu.memory_space<vmem>>, %arg12: memref<1x32xf32, #tpu.memory_space<vmem>>, %arg13: memref<1x32xf32, #tpu.memory_space<vmem>>, %arg14: memref<16x32xf32, #tpu.memory_space<vmem>>, %arg15: memref<16x32xf32, #tpu.memory_space<vmem>>, %arg16: memref<16x32xf32, #tpu.memory_space<vmem>>) attributes {dimension_semantics = [#tpu.dimension_semantics<parallel>, #tpu.dimension_semantics<arbitrary>], iteration_bounds = array<i64: 1, 1>, scalar_prefetch = 0 : i64, scratch_operands = 2 : i64, tpu.core_type = #tpu.core_type<tc>, window_params = [{transform_indices = @transform_0, window_bounds = array<i64: 16, 32>}, {transform_indices = @transform_1, window_bounds = array<i64: 16, 32>}, {pipeline_mode = #tpu.pipeline_mode<synchronous>, transform_indices = @transform_2, window_bounds = array<i64: 32, 32>}, {pipeline_mode = #tpu.pipeline_mode<synchronous>, transform_indices = @transform_3, window_bounds = array<i64: 1, 32>}, {pipeline_mode = #tpu.pipeline_mode<synchronous>, transform_indices = @transform_4, window_bounds = array<i64: 1, 32>}, {pipeline_mode = #tpu.pipeline_mode<synchronous>, transform_indices = @transform_5, window_bounds = array<i64: 1, 32>}, {transform_indices = @transform_6, window_bounds = array<i64: 32, 64>}, {transform_indices = @transform_7, window_bounds = array<i64: 1, 64>}, {transform_indices = @transform_8, window_bounds = array<i64: 64, 32>}, {pipeline_mode = #tpu.pipeline_mode<synchronous>, transform_indices = @transform_9, window_bounds = array<i64: 1, 32>}, {pipeline_mode = #tpu.pipeline_mode<synchronous>, transform_indices = @transform_10, window_bounds = array<i64: 1, 32>}, {pipeline_mode = #tpu.pipeline_mode<synchronous>, transform_indices = @transform_11, window_bounds = array<i64: 1, 32>}, {transform_indices = @transform_12, window_bounds = array<i64: 16, 32>}]} {
    %c0_i32 = arith.constant 0 : i32
    %0 = arith.cmpi eq, %arg1, %c0_i32 : i32
    %1 = arith.extui %0 : i1 to i32
    %c0_i32_0 = arith.constant 0 : i32
    %2 = arith.cmpi ne, %1, %c0_i32_0 : i32
    scf.if %2 {
      %c0_16 = arith.constant 0 : index
      %c0_17 = arith.constant 0 : index
      %21 = vector.load %arg2[%c0_16, %c0_17] : memref<16x32xbf16, #tpu.memory_space<vmem>>, vector<16x32xbf16>
      %c0_18 = arith.constant 0 : index
      %c0_19 = arith.constant 0 : index
      %22 = vector.load %arg4[%c0_18, %c0_19] : memref<32x32xbf16, #tpu.memory_space<vmem>>, vector<32x32xbf16>
      %cst_20 = arith.constant dense<0.000000e+00> : vector<16x32xf32>
      %23 = tpu.matmul %21, %22, %cst_20 {dimension_numbers = #tpu.dot_dimension_numbers<[1], [0], [0], [1], [0, 0, 1, 1], [], []>} : vector<16x32xbf16>, vector<32x32xbf16>, vector<16x32xf32> -> vector<16x32xf32>
      %c0_21 = arith.constant 0 : index
      %c0_22 = arith.constant 0 : index
      %24 = vector.load %arg5[%c0_21, %c0_22] : memref<1x32xf32, #tpu.memory_space<vmem>>, vector<1x32xf32>
      %25 = vector.broadcast %24 : vector<1x32xf32> to vector<16x32xf32>
      %26 = arith.addf %23, %25 : vector<16x32xf32>
      %c0_23 = arith.constant 0 : index
      %c0_24 = arith.constant 0 : index
      %27 = vector.load %arg3[%c0_23, %c0_24] : memref<16x32xf32, #tpu.memory_space<vmem>>, vector<16x32xf32>
      %28 = arith.addf %27, %26 : vector<16x32xf32>
      %cst_25 = arith.constant dense<0.000000e+00> : vector<16xf32>
      %29 = vector.multi_reduction <add>, %28, %cst_25 [1] : vector<16x32xf32> to vector<16xf32>
      %30 = vector.shape_cast %29 : vector<16xf32> to vector<16x1xf32>
      %cst_26 = arith.constant 3.200000e+01 : f32
      %31 = vector.broadcast %cst_26 : f32 to vector<16x1xf32>
      %32 = arith.divf %30, %31 : vector<16x1xf32>
      %33 = vector.broadcast %32 : vector<16x1xf32> to vector<16x32xf32>
      %34 = arith.subf %28, %33 : vector<16x32xf32>
      %35 = arith.mulf %34, %34 : vector<16x32xf32>
      %cst_27 = arith.constant dense<0.000000e+00> : vector<16xf32>
      %36 = vector.multi_reduction <add>, %35, %cst_27 [1] : vector<16x32xf32> to vector<16xf32>
      %37 = vector.shape_cast %36 : vector<16xf32> to vector<16x1xf32>
      %cst_28 = arith.constant 3.200000e+01 : f32
      %38 = vector.broadcast %cst_28 : f32 to vector<16x1xf32>
      %39 = arith.divf %37, %38 : vector<16x1xf32>
      %40 = vector.broadcast %32 : vector<16x1xf32> to vector<16x32xf32>
      %41 = arith.subf %28, %40 : vector<16x32xf32>
      %cst_29 = arith.constant 9.99999974E-6 : f32
      %42 = vector.broadcast %cst_29 : f32 to vector<16x1xf32>
      %43 = arith.addf %39, %42 : vector<16x1xf32>
      %44 = math.rsqrt %43 : vector<16x1xf32>
      %45 = vector.broadcast %44 : vector<16x1xf32> to vector<16x32xf32>
      %46 = arith.mulf %41, %45 : vector<16x32xf32>
      %c0_30 = arith.constant 0 : index
      %c0_31 = arith.constant 0 : index
      %47 = vector.load %arg6[%c0_30, %c0_31] : memref<1x32xf32, #tpu.memory_space<vmem>>, vector<1x32xf32>
      %48 = vector.broadcast %47 : vector<1x32xf32> to vector<16x32xf32>
      %49 = arith.mulf %46, %48 : vector<16x32xf32>
      %c0_32 = arith.constant 0 : index
      %c0_33 = arith.constant 0 : index
      %50 = vector.load %arg7[%c0_32, %c0_33] : memref<1x32xf32, #tpu.memory_space<vmem>>, vector<1x32xf32>
      %51 = vector.broadcast %50 : vector<1x32xf32> to vector<16x32xf32>
      %52 = arith.addf %49, %51 : vector<16x32xf32>
      %c0_34 = arith.constant 0 : index
      %c0_35 = arith.constant 0 : index
      %53 = vector.load %arg15[%c0_34, %c0_35] : memref<16x32xf32, #tpu.memory_space<vmem>>, vector<16x32xf32>
      tpu.vector_store %arg15[%c0_34, %c0_35], %52 {strides = array<i32>} : memref<16x32xf32, #tpu.memory_space<vmem>>, vector<16x32xf32>,
      %cst_36 = arith.constant 0.000000e+00 : f32
      %54 = vector.broadcast %cst_36 : f32 to vector<16x32xf32>
      %c0_37 = arith.constant 0 : index
      %c0_38 = arith.constant 0 : index
      %55 = vector.load %arg16[%c0_37, %c0_38] : memref<16x32xf32, #tpu.memory_space<vmem>>, vector<16x32xf32>
      tpu.vector_store %arg16[%c0_37, %c0_38], %54 {strides = array<i32>} : memref<16x32xf32, #tpu.memory_space<vmem>>, vector<16x32xf32>,
    } else {
    }
    %c0 = arith.constant 0 : index
    %c0_1 = arith.constant 0 : index
    %3 = vector.load %arg15[%c0, %c0_1] : memref<16x32xf32, #tpu.memory_space<vmem>>, vector<16x32xf32>
    %4 = arith.truncf %3 : vector<16x32xf32> to vector<16x32xbf16>
    %c0_2 = arith.constant 0 : index
    %c0_3 = arith.constant 0 : index
    %5 = vector.load %arg8[%c0_2, %c0_3] : memref<32x64xbf16, #tpu.memory_space<vmem>>, vector<32x64xbf16>
    %cst = arith.constant dense<0.000000e+00> : vector<16x64xf32>
    %6 = tpu.matmul %4, %5, %cst {dimension_numbers = #tpu.dot_dimension_numbers<[1], [0], [0], [1], [0, 0, 1, 1], [], []>} : vector<16x32xbf16>, vector<32x64xbf16>, vector<16x64xf32> -> vector<16x64xf32>
    %c0_4 = arith.constant 0 : index
    %c0_5 = arith.constant 0 : index
    %7 = vector.load %arg9[%c0_4, %c0_5] : memref<1x64xf32, #tpu.memory_space<vmem>>, vector<1x64xf32>
    %8 = vector.broadcast %7 : vector<1x64xf32> to vector<16x64xf32>
    %9 = arith.addf %6, %8 : vector<16x64xf32>
    %cst_6 = arith.constant 0.000000e+00 : f32
    %10 = vector.broadcast %cst_6 : f32 to vector<16x64xf32>
    %11 = arith.maximumf %9, %10 : vector<16x64xf32>
    %c0_7 = arith.constant 0 : index
    %c0_8 = arith.constant 0 : index
    %12 = vector.load %arg16[%c0_7, %c0_8] : memref<16x32xf32, #tpu.memory_space<vmem>>, vector<16x32xf32>
    %13 = arith.truncf %11 : vector<16x64xf32> to vector<16x64xbf16>
    %c0_9 = arith.constant 0 : index
    %c0_10 = arith.constant 0 : index
    %14 = vector.load %arg10[%c0_9, %c0_10] : memref<64x32xbf16, #tpu.memory_space<vmem>>, vector<64x32xbf16>
    %cst_11 = arith.constant dense<0.000000e+00> : vector<16x32xf32>
    %15 = tpu.matmul %13, %14, %cst_11 {dimension_numbers = #tpu.dot_dimension_numbers<[1], [0], [0], [1], [0, 0, 1, 1], [], []>} : vector<16x64xbf16>, vector<64x32xbf16>, vector<16x32xf32> -> vector<16x32xf32>
    %16 = arith.addf %12, %15 : vector<16x32xf32>
    %c0_12 = arith.constant 0 : index
    %c0_13 = arith.constant 0 : index
    %17 = vector.load %arg16[%c0_12, %c0_13] : memref<16x32xf32, #tpu.memory_space<vmem>>, vector<16x32xf32>
    tpu.vector_store %arg16[%c0_12, %c0_13], %16 {strides = array<i32>} : memref<16x32xf32, #tpu.memory_space<vmem>>, vector<16x32xf32>,
    %c0_i32_14 = arith.constant 0 : i32
    %18 = arith.cmpi eq, %arg1, %c0_i32_14 : i32
    %19 = arith.extui %18 : i1 to i32
    %c0_i32_15 = arith.constant 0 : i32
    %20 = arith.cmpi ne, %19, %c0_i32_15 : i32
    scf.if %20 {
      %c0_16 = arith.constant 0 : index
      %c0_17 = arith.constant 0 : index
      %21 = vector.load %arg15[%c0_16, %c0_17] : memref<16x32xf32, #tpu.memory_space<vmem>>, vector<16x32xf32>
      %c0_18 = arith.constant 0 : index
      %c0_19 = arith.constant 0 : index
      %22 = vector.load %arg16[%c0_18, %c0_19] : memref<16x32xf32, #tpu.memory_space<vmem>>, vector<16x32xf32>
      %23 = arith.addf %21, %22 : vector<16x32xf32>
      %c0_20 = arith.constant 0 : index
      %c0_21 = arith.constant 0 : index
      %24 = vector.load %arg11[%c0_20, %c0_21] : memref<1x32xf32, #tpu.memory_space<vmem>>, vector<1x32xf32>
      %25 = vector.broadcast %24 : vector<1x32xf32> to vector<16x32xf32>
      %26 = arith.addf %23, %25 : vector<16x32xf32>
      %cst_22 = arith.constant dense<0.000000e+00> : vector<16xf32>
      %27 = vector.multi_reduction <add>, %26, %cst_22 [1] : vector<16x32xf32> to vector<16xf32>
      %28 = vector.shape_cast %27 : vector<16xf32> to vector<16x1xf32>
      %cst_23 = arith.constant 3.200000e+01 : f32
      %29 = vector.broadcast %cst_23 : f32 to vector<16x1xf32>
      %30 = arith.divf %28, %29 : vector<16x1xf32>
      %31 = vector.broadcast %30 : vector<16x1xf32> to vector<16x32xf32>
      %32 = arith.subf %26, %31 : vector<16x32xf32>
      %33 = arith.mulf %32, %32 : vector<16x32xf32>
      %cst_24 = arith.constant dense<0.000000e+00> : vector<16xf32>
      %34 = vector.multi_reduction <add>, %33, %cst_24 [1] : vector<16x32xf32> to vector<16xf32>
      %35 = vector.shape_cast %34 : vector<16xf32> to vector<16x1xf32>
      %cst_25 = arith.constant 3.200000e+01 : f32
      %36 = vector.broadcast %cst_25 : f32 to vector<16x1xf32>
      %37 = arith.divf %35, %36 : vector<16x1xf32>
      %38 = vector.broadcast %30 : vector<16x1xf32> to vector<16x32xf32>
      %39 = arith.subf %26, %38 : vector<16x32xf32>
      %cst_26 = arith.constant 9.99999974E-6 : f32
      %40 = vector.broadcast %cst_26 : f32 to vector<16x1xf32>
      %41 = arith.addf %37, %40 : vector<16x1xf32>
      %42 = math.rsqrt %41 : vector<16x1xf32>
      %43 = vector.broadcast %42 : vector<16x1xf32> to vector<16x32xf32>
      %44 = arith.mulf %39, %43 : vector<16x32xf32>
      %c0_27 = arith.constant 0 : index
      %c0_28 = arith.constant 0 : index
      %45 = vector.load %arg12[%c0_27, %c0_28] : memref<1x32xf32, #tpu.memory_space<vmem>>, vector<1x32xf32>
      %46 = vector.broadcast %45 : vector<1x32xf32> to vector<16x32xf32>
      %47 = arith.mulf %44, %46 : vector<16x32xf32>
      %c0_29 = arith.constant 0 : index
      %c0_30 = arith.constant 0 : index
      %48 = vector.load %arg13[%c0_29, %c0_30] : memref<1x32xf32, #tpu.memory_space<vmem>>, vector<1x32xf32>
      %49 = vector.broadcast %48 : vector<1x32xf32> to vector<16x32xf32>
      %50 = arith.addf %47, %49 : vector<16x32xf32>
      %c0_31 = arith.constant 0 : index
      %c0_32 = arith.constant 0 : index
      %51 = vector.load %arg14[%c0_31, %c0_32] : memref<16x32xf32, #tpu.memory_space<vmem>>, vector<16x32xf32>
      tpu.vector_store %arg14[%c0_31, %c0_32], %50 {strides = array<i32>} : memref<16x32xf32, #tpu.memory_space<vmem>>, vector<16x32xf32>,
    } else {
    }
    return
  }
  func.func @transform_0(%arg0: i32, %arg1: i32) -> (i32, i32) {
    %c0_i32 = arith.constant 0 : i32
    %c0_i32_0 = arith.constant 0 : i32
    return %arg0, %c0_i32 : i32, i32
  }
  func.func @transform_1(%arg0: i32, %arg1: i32) -> (i32, i32) {
    %c0_i32 = arith.constant 0 : i32
    %c0_i32_0 = arith.constant 0 : i32
    return %arg0, %c0_i32 : i32, i32
  }
  func.func @transform_2(%arg0: i32, %arg1: i32) -> (i32, i32) {
    %c0_i32 = arith.constant 0 : i32
    %c0_i32_0 = arith.constant 0 : i32
    %c0_i32_1 = arith.constant 0 : i32
    return %c0_i32, %c0_i32_0 : i32, i32
  }
  func.func @transform_3(%arg0: i32, %arg1: i32) -> (i32, i32) {
    %c0_i32 = arith.constant 0 : i32
    %c0_i32_0 = arith.constant 0 : i32
    %c0_i32_1 = arith.constant 0 : i32
    return %c0_i32, %c0_i32_0 : i32, i32
  }
  func.func @transform_4(%arg0: i32, %arg1: i32) -> (i32, i32) {
    %c0_i32 = arith.constant 0 : i32
    %c0_i32_0 = arith.constant 0 : i32
    %c0_i32_1 = arith.constant 0 : i32
    return %c0_i32, %c0_i32_0 : i32, i32
  }
  func.func @transform_5(%arg0: i32, %arg1: i32) -> (i32, i32) {
    %c0_i32 = arith.constant 0 : i32
    %c0_i32_0 = arith.constant 0 : i32
    %c0_i32_1 = arith.constant 0 : i32
    return %c0_i32, %c0_i32_0 : i32, i32
  }
  func.func @transform_6(%arg0: i32, %arg1: i32) -> (i32, i32) {
    %c0_i32 = arith.constant 0 : i32
    %c0_i32_0 = arith.constant 0 : i32
    return %c0_i32, %arg1 : i32, i32
  }
  func.func @transform_7(%arg0: i32, %arg1: i32) -> (i32, i32) {
    %c0_i32 = arith.constant 0 : i32
    %c0_i32_0 = arith.constant 0 : i32
    return %c0_i32, %arg1 : i32, i32
  }
  func.func @transform_8(%arg0: i32, %arg1: i32) -> (i32, i32) {
    %c0_i32 = arith.constant 0 : i32
    %c0_i32_0 = arith.constant 0 : i32
    return %arg1, %c0_i32 : i32, i32
  }
  func.func @transform_9(%arg0: i32, %arg1: i32) -> (i32, i32) {
    %c0_i32 = arith.constant 0 : i32
    %c0_i32_0 = arith.constant 0 : i32
    %c0_i32_1 = arith.constant 0 : i32
    return %c0_i32, %c0_i32_0 : i32, i32
  }
  func.func @transform_10(%arg0: i32, %arg1: i32) -> (i32, i32) {
    %c0_i32 = arith.constant 0 : i32
    %c0_i32_0 = arith.constant 0 : i32
    %c0_i32_1 = arith.constant 0 : i32
    return %c0_i32, %c0_i32_0 : i32, i32
  }
  func.func @transform_11(%arg0: i32, %arg1: i32) -> (i32, i32) {
    %c0_i32 = arith.constant 0 : i32
    %c0_i32_0 = arith.constant 0 : i32
    %c0_i32_1 = arith.constant 0 : i32
    return %c0_i32, %c0_i32_0 : i32, i32
  }
  func.func @transform_12(%arg0: i32, %arg1: i32) -> (i32, i32) {
    %c0_i32 = arith.constant 0 : i32
    %c0_i32_0 = arith.constant 0 : i32
    return %arg0, %c0_i32 : i32, i32
  }
}

</mosaic_0001>

<llo_original>
// kernel: encoder_new_forward.8
$region0: #{encoder_new_forward.8}
  #allocation0 [shape = 'u32[]', space=smem, size = 0x4, offset = 0x4, fixed_abs, tag = 'smem constant byte address 0x4 - core index']
  #allocation1 [shape = 'u32[144,128]{1,0:T(1,128)}', space=vmem, size = 0x12000, scoped, tag = 'internal scratch']
  %s0 = inlined_call_operand.vmem [shape: f32[16,32], index: 0, kind: input, shape index: {}]
  %s1 = inlined_call_operand.vmem [shape: bf16[32,32], index: 1, kind: input, shape index: {}]
  %s2 = inlined_call_operand.vmem [shape: bf16[32,32], index: 2, kind: input, shape index: {}]
  %s3 = inlined_call_operand.vmem [shape: bf16[32,32], index: 3, kind: input, shape index: {}]
  %s4 = inlined_call_operand.vmem [shape: f32[1,32], index: 4, kind: input, shape index: {}]
  %s5 = inlined_call_operand.vmem [shape: f32[1,32], index: 5, kind: input, shape index: {}]
  %s6 = inlined_call_operand.vmem [shape: f32[1,32], index: 6, kind: input, shape index: {}]
  %s7 = inlined_call_operand.vmem [shape: bf16[16,32], index: 7, kind: output, shape index: {0}]
  %s8 = inlined_call_operand.vmem [shape: bf16[16,32], index: 8, kind: output, shape index: {1}]
  %s9 = inlined_call_operand.vmem [shape: bf16[16,32], index: 9, kind: output, shape index: {2}]
  %10 = xla_tuple %s7, %s8, %s9
  %s11 = sld [smem:[#allocation0]]
  $region54: #{encoder_new_forward.8} parent=0
    _
  %s13 = ssub.s32 1, %s11
  %s14 = scalar_select 0, %s13, %s11
  // Predicated region
  $region2: #{encoder_new_forward.8} parent=0 // pred_check
    _
  $region3: #{encoder_new_forward.8} parent=0 // pred_check_branch
    %16 = sbr.rel (0) target = $region5
  $region4: #{encoder_new_forward.8} parent=0 // pred_region
    _
  $region5: #{encoder_new_forward.8} parent=0 // pred_fallthru
    _
  // Predicated region
  $region6: #{encoder_new_forward.8} parent=0 // pred_check
    _
  $region7: #{encoder_new_forward.8} parent=0 // pred_check_branch
    %18 = sbr.rel (0) target = $region9
  $region8: #{encoder_new_forward.8} parent=0 // pred_region
    _
  $region9: #{encoder_new_forward.8} parent=0 // pred_fallthru
    _
  // Predicated region
  $region10: #{encoder_new_forward.8} parent=0 // pred_check
    _
  $region11: #{encoder_new_forward.8} parent=0 // pred_check_branch
    %20 = sbr.rel (0) target = $region13
  $region12: #{encoder_new_forward.8} parent=0 // pred_region
    _
  $region13: #{encoder_new_forward.8} parent=0 // pred_fallthru
    _
  // Predicated region
  $region14: #{encoder_new_forward.8} parent=0 // pred_check
    _
  $region15: #{encoder_new_forward.8} parent=0 // pred_check_branch
    %22 = sbr.rel (0) target = $region17
  $region16: #{encoder_new_forward.8} parent=0 // pred_region
    _
  $region17: #{encoder_new_forward.8} parent=0 // pred_fallthru
    _
  // Predicated region
  $region18: #{encoder_new_forward.8} parent=0 // pred_check
    _
  $region19: #{encoder_new_forward.8} parent=0 // pred_check_branch
    %24 = sbr.rel (0) target = $region21
  $region20: #{encoder_new_forward.8} parent=0 // pred_region
    _
  $region21: #{encoder_new_forward.8} parent=0 // pred_fallthru
    _
  // Predicated region
  $region22: #{encoder_new_forward.8} parent=0 // pred_check
    _
  $region23: #{encoder_new_forward.8} parent=0 // pred_check_branch
    %26 = sbr.rel (0) target = $region25
  $region24: #{encoder_new_forward.8} parent=0 // pred_region
    _
  $region25: #{encoder_new_forward.8} parent=0 // pred_fallthru
    _
  // Predicated region
  $region26: #{encoder_new_forward.8} parent=0 // pred_check
    _
  $region27: #{encoder_new_forward.8} parent=0 // pred_check_branch
    %28 = sbr.rel (0) target = $region29
  $region28: #{encoder_new_forward.8} parent=0 // pred_region
    _
  $region29: #{encoder_new_forward.8} parent=0 // pred_fallthru
    _
  %v30 = vld [vmem:[%s0] sm:$0xff]
  %v31 = vld [vmem:[%s0 + $0x8] sm:$0xff]
  %v32 = vpack.c.bf16 %v31, %v30
  %v33 = vld [vmem:[%s1] sm:$0xf]
  %v34 = vld [vmem:[%s1 + $0x4] sm:$0xf]
  %v35 = vld [vmem:[%s1 + $0x8] sm:$0xf]
  %v36 = vld [vmem:[%s1 + $0xc] sm:$0xf]
  %v37 = vld [vmem:[%s4] sm:$0x1]
  %v39 = vlaneseq
  %v40 = vshrl.u32 %v39, 7
  %v41 = vsub.s32 0, %v40
  %v42 = vrot.slane %v37, %v41
  %v48 = vunpack.c.l.b16 %v33
  %v49 = vunpack.c.l.b16 %v34
  %v50 = vunpack.c.l.b16 %v35
  %v51 = vunpack.c.l.b16 %v36
  %v52 = vpack.c.b16 %v49, %v48
  %v53 = vpack.c.b16 %v51, %v50
  %vm56 = vcmask 261120
  %v58 = vsel %vm56, %v32, 0
  %60 = vmatprep.subr.bf16.mxu0 0
  %61 = vmatpush1.bf16.msra.mxu0 %v52
  %62 = vmatprep.subr.bf16.mxu0 0
  %63 = vmatpush1.bf16.msra.mxu0 %v53
  %64 = vmatprep.subr.bf16.mxu0 0
  %65 = vmatpush1.bf16.msra.mxu0 0
  %66 = vmatprep.subr.bf16.mxu0 0
  %67 = vmatpush1.bf16.msra.mxu0 0
  %68 = vmatprep.subr.bf16.mxu0 0
  %69 = vmatpush1.bf16.msra.mxu0 0
  %70 = vmatprep.subr.bf16.mxu0 0
  %71 = vmatpush1.bf16.msra.mxu0 0
  %72 = vmatprep.subr.bf16.mxu0 0
  %73 = vmatpush1.bf16.msra.mxu0 0
  %74 = vmatprep.subr.bf16.mxu0 0
  %75 = vmatpush1.bf16.msra.mxu0 0
  %76 = vmatprep.subr.bf16.mxu0 0
  %77 = vmatpush1.bf16.msra.mxu0 0
  %78 = vmatprep.subr.bf16.mxu0 0
  %79 = vmatpush1.bf16.msra.mxu0 0
  %80 = vmatprep.subr.bf16.mxu0 0
  %81 = vmatpush1.bf16.msra.mxu0 0
  %82 = vmatprep.subr.bf16.mxu0 0
  %83 = vmatpush1.bf16.msra.mxu0 0
  %84 = vmatprep.subr.bf16.mxu0 0
  %85 = vmatpush1.bf16.msra.mxu0 0
  %86 = vmatprep.subr.bf16.mxu0 0
  %87 = vmatpush1.bf16.msra.mxu0 0
  %88 = vmatprep.subr.bf16.mxu0 0
  %89 = vmatpush1.bf16.msra.mxu0 0
  %90 = vmatprep.subr.bf16.mxu0 0
  %91 = vmatpush1.bf16.msra.mxu0 0
  %92 = vmatprep.mubr.bf16.mxu0 0
  %93 = vmatmul.mubr.bf16.gmra.mrb[0].mxu0 %v58
  %v94 = vpop.f32.mrb[0].mxu0
  %v95 = vadd.f32 %v42, %v94
  %v96 = vpop.f32.mrb[0].mxu0
  %v97 = vpop.f32.mrb[0].mxu0
  %v98 = vadd.f32 %v42, %v97
  %v99 = vpop.f32.mrb[0].mxu0
  %100 = vdwg.mxu0
  %v101 = vld [vmem:[%s2] sm:$0xf]
  %v102 = vld [vmem:[%s2 + $0x4] sm:$0xf]
  %v103 = vld [vmem:[%s2 + $0x8] sm:$0xf]
  %v104 = vld [vmem:[%s2 + $0xc] sm:$0xf]
  %v105 = vld [vmem:[%s5] sm:$0x1]
  %v107 = vlaneseq
  %v108 = vshrl.u32 %v107, 7
  %v109 = vsub.s32 0, %v108
  %v110 = vrot.slane %v105, %v109
  %v116 = vunpack.c.l.b16 %v101
  %v117 = vunpack.c.l.b16 %v102
  %v118 = vunpack.c.l.b16 %v103
  %v119 = vunpack.c.l.b16 %v104
  %v120 = vpack.c.b16 %v117, %v116
  %v121 = vpack.c.b16 %v119, %v118
  %124 = vmatprep.subr.bf16.mxu0 0
  %125 = vmatpush1.bf16.msra.mxu0 %v120
  %126 = vmatprep.subr.bf16.mxu0 0
  %127 = vmatpush1.bf16.msra.mxu0 %v121
  %128 = vmatprep.subr.bf16.mxu0 0
  %129 = vmatpush1.bf16.msra.mxu0 0
  %130 = vmatprep.subr.bf16.mxu0 0
  %131 = vmatpush1.bf16.msra.mxu0 0
  %132 = vmatprep.subr.bf16.mxu0 0
  %133 = vmatpush1.bf16.msra.mxu0 0
  %134 = vmatprep.subr.bf16.mxu0 0
  %135 = vmatpush1.bf16.msra.mxu0 0
  %136 = vmatprep.subr.bf16.mxu0 0
  %137 = vmatpush1.bf16.msra.mxu0 0
  %138 = vmatprep.subr.bf16.mxu0 0
  %139 = vmatpush1.bf16.msra.mxu0 0
  %140 = vmatprep.subr.bf16.mxu0 0
  %141 = vmatpush1.bf16.msra.mxu0 0
  %142 = vmatprep.subr.bf16.mxu0 0
  %143 = vmatpush1.bf16.msra.mxu0 0
  %144 = vmatprep.subr.bf16.mxu0 0
  %145 = vmatpush1.bf16.msra.mxu0 0
  %146 = vmatprep.subr.bf16.mxu0 0
  %147 = vmatpush1.bf16.msra.mxu0 0
  %148 = vmatprep.subr.bf16.mxu0 0
  %149 = vmatpush1.bf16.msra.mxu0 0
  %150 = vmatprep.subr.bf16.mxu0 0
  %151 = vmatpush1.bf16.msra.mxu0 0
  %152 = vmatprep.subr.bf16.mxu0 0
  %153 = vmatpush1.bf16.msra.mxu0 0
  %154 = vmatprep.subr.bf16.mxu0 0
  %155 = vmatpush1.bf16.msra.mxu0 0
  %156 = vmatprep.mubr.bf16.mxu0 0
  %157 = vmatmul.mubr.bf16.gmra.mrb[0].mxu0 %v58
  %v158 = vpop.f32.mrb[0].mxu0
  %v159 = vadd.f32 %v110, %v158
  %v160 = vpop.f32.mrb[0].mxu0
  %v161 = vpop.f32.mrb[0].mxu0
  %v162 = vadd.f32 %v110, %v161
  %v163 = vpop.f32.mrb[0].mxu0
  %164 = vdwg.mxu0
  %v165 = vld [vmem:[%s3] sm:$0xf]
  %v166 = vld [vmem:[%s3 + $0x4] sm:$0xf]
  %v167 = vld [vmem:[%s3 + $0x8] sm:$0xf]
  %v168 = vld [vmem:[%s3 + $0xc] sm:$0xf]
  %v169 = vld [vmem:[%s6] sm:$0x1]
  %v171 = vlaneseq
  %v172 = vshrl.u32 %v171, 7
  %v173 = vsub.s32 0, %v172
  %v174 = vrot.slane %v169, %v173
  %v180 = vunpack.c.l.b16 %v165
  %v181 = vunpack.c.l.b16 %v166
  %v182 = vunpack.c.l.b16 %v167
  %v183 = vunpack.c.l.b16 %v168
  %v184 = vpack.c.b16 %v181, %v180
  %v185 = vpack.c.b16 %v183, %v182
  %188 = vmatprep.subr.bf16.mxu0 0
  %189 = vmatpush1.bf16.msra.mxu0 %v184
  %190 = vmatprep.subr.bf16.mxu0 0
  %191 = vmatpush1.bf16.msra.mxu0 %v185
  %192 = vmatprep.subr.bf16.mxu0 0
  %193 = vmatpush1.bf16.msra.mxu0 0
  %194 = vmatprep.subr.bf16.mxu0 0
  %195 = vmatpush1.bf16.msra.mxu0 0
  %196 = vmatprep.subr.bf16.mxu0 0
  %197 = vmatpush1.bf16.msra.mxu0 0
  %198 = vmatprep.subr.bf16.mxu0 0
  %199 = vmatpush1.bf16.msra.mxu0 0
  %200 = vmatprep.subr.bf16.mxu0 0
  %201 = vmatpush1.bf16.msra.mxu0 0
  %202 = vmatprep.subr.bf16.mxu0 0
  %203 = vmatpush1.bf16.msra.mxu0 0
  %204 = vmatprep.subr.bf16.mxu0 0
  %205 = vmatpush1.bf16.msra.mxu0 0
  %206 = vmatprep.subr.bf16.mxu0 0
  %207 = vmatpush1.bf16.msra.mxu0 0
  %208 = vmatprep.subr.bf16.mxu0 0
  %209 = vmatpush1.bf16.msra.mxu0 0
  %210 = vmatprep.subr.bf16.mxu0 0
  %211 = vmatpush1.bf16.msra.mxu0 0
  %212 = vmatprep.subr.bf16.mxu0 0
  %213 = vmatpush1.bf16.msra.mxu0 0
  %214 = vmatprep.subr.bf16.mxu0 0
  %215 = vmatpush1.bf16.msra.mxu0 0
  %216 = vmatprep.subr.bf16.mxu0 0
  %217 = vmatpush1.bf16.msra.mxu0 0
  %218 = vmatprep.subr.bf16.mxu0 0
  %219 = vmatpush1.bf16.msra.mxu0 0
  %220 = vmatprep.mubr.bf16.mxu0 0
  %221 = vmatmul.mubr.bf16.gmra.mrb[0].mxu0 %v58
  %v222 = vpop.f32.mrb[0].mxu0
  %v223 = vadd.f32 %v174, %v222
  %v224 = vpop.f32.mrb[0].mxu0
  %v225 = vpop.f32.mrb[0].mxu0
  %v226 = vadd.f32 %v174, %v225
  %v227 = vpop.f32.mrb[0].mxu0
  %228 = vdwg.mxu0
  %v229 = vpack.c.bf16 %v98, %v95
  %v231 = vunpack.c.l.b16 %v229
  %v232 = vunpack.c.h.b16 %v229
  %v233 = vpack.c.b16 %v231, %v231
  %v234 = vpack.c.b16 %v232, %v232
  %vm237 = vcmask 257024
  %238 = vst.msk [vmem:[%s7] sm:$0xf] %vm237, %v233
  %239 = vst.msk [vmem:[%s7 + $0x4] sm:$0xf] %vm237, %v234
  %v240 = vpack.c.bf16 %v162, %v159
  %v242 = vunpack.c.l.b16 %v240
  %v243 = vunpack.c.h.b16 %v240
  %v244 = vpack.c.b16 %v242, %v242
  %v245 = vpack.c.b16 %v243, %v243
  %248 = vst.msk [vmem:[%s8] sm:$0xf] %vm237, %v244
  %249 = vst.msk [vmem:[%s8 + $0x4] sm:$0xf] %vm237, %v245
  %v250 = vmul.f32 %v223, 0.70710677
  %v251 = vmul.f32 %v226, 0.70710677
  %v252 = vpack.c.bf16 %v251, %v250
  %v254 = vunpack.c.l.b16 %v252
  %v255 = vunpack.c.h.b16 %v252
  %v256 = vpack.c.b16 %v254, %v254
  %v257 = vpack.c.b16 %v255, %v255
  %260 = vst.msk [vmem:[%s9] sm:$0xf] %vm237, %v256
  %261 = vst.msk [vmem:[%s9 + $0x4] sm:$0xf] %vm237, %v257
  // Predicated region
  $region30: #{encoder_new_forward.8} parent=0 // pred_check
    _
  $region31: #{encoder_new_forward.8} parent=0 // pred_check_branch
    %263 = sbr.rel (0) target = $region33
  $region32: #{encoder_new_forward.8} parent=0 // pred_region
    _
  $region33: #{encoder_new_forward.8} parent=0 // pred_fallthru
    _
  // Predicated region
  $region34: #{encoder_new_forward.8} parent=0 // pred_check
    _
  $region35: #{encoder_new_forward.8} parent=0 // pred_check_branch
    %265 = sbr.rel (0) target = $region37
  $region36: #{encoder_new_forward.8} parent=0 // pred_region
    _
  $region37: #{encoder_new_forward.8} parent=0 // pred_fallthru
    _
  // Predicated region
  $region38: #{encoder_new_forward.8} parent=0 // pred_check
    _
  $region39: #{encoder_new_forward.8} parent=0 // pred_check_branch
    %267 = sbr.rel (0) target = $region41
  $region40: #{encoder_new_forward.8} parent=0 // pred_region
    _
  $region41: #{encoder_new_forward.8} parent=0 // pred_fallthru
    _
  // Predicated region
  $region42: #{encoder_new_forward.8} parent=0 // pred_check
    _
  $region43: #{encoder_new_forward.8} parent=0 // pred_check_branch
    %269 = sbr.rel (0) target = $region45
  $region44: #{encoder_new_forward.8} parent=0 // pred_region
    _
  $region45: #{encoder_new_forward.8} parent=0 // pred_fallthru
    _
  // Predicated region
  $region46: #{encoder_new_forward.8} parent=0 // pred_check
    _
  $region47: #{encoder_new_forward.8} parent=0 // pred_check_branch
    %271 = sbr.rel (0) target = $region49
  $region48: #{encoder_new_forward.8} parent=0 // pred_region
    _
  $region49: #{encoder_new_forward.8} parent=0 // pred_fallthru
    _
  // Predicated region
  $region50: #{encoder_new_forward.8} parent=0 // pred_check
    _
  $region51: #{encoder_new_forward.8} parent=0 // pred_check_branch
    %273 = sbr.rel (0) target = $region53
  $region52: #{encoder_new_forward.8} parent=0 // pred_region
    _
  $region53: #{encoder_new_forward.8} parent=0 // pred_fallthru
    _

// kernel: encoder_new_forward.7
$region0: #{encoder_new_forward.7}
  #allocation0 [shape = 'u32[]', space=smem, size = 0x4, offset = 0x4, fixed_abs, tag = 'smem constant byte address 0x4 - core index']
  #allocation1 [shape = 'u32[144,128]{1,0:T(1,128)}', space=vmem, size = 0x12000, scoped, tag = 'internal scratch']
  %s0 = inlined_call_operand.vmem [shape: f32[16,32], index: 0, kind: input, shape index: {}]
  %s1 = inlined_call_operand.vmem [shape: f32[16,1], index: 1, kind: input, shape index: {}]
  %s2 = inlined_call_operand.vmem [shape: f32[16,32], index: 2, kind: input, shape index: {}]
  %s3 = inlined_call_operand.vmem [shape: f32[1,16], index: 3, kind: input, shape index: {}]
  %s4 = inlined_call_operand.vmem [shape: f32[1,16], index: 4, kind: input, shape index: {}]
  %s5 = inlined_call_operand.vmem [shape: f32[16,32], index: 5, kind: input, shape index: {}]
  %s6 = inlined_call_operand.vmem [shape: f32[1,32], index: 6, kind: input, shape index: {}]
  %s7 = inlined_call_operand.vmem [shape: f32[1,32], index: 7, kind: input, shape index: {}]
  %s8 = inlined_call_operand.vmem [shape: f32[16,32], index: 8, kind: output, shape index: {}]
  %s9 = sld [smem:[#allocation0]]
  $region42: #{encoder_new_forward.7} parent=0
    _
  %s11 = ssub.s32 1, %s9
  %s12 = scalar_select 0, %s11, %s9
  // Predicated region
  $region2: #{encoder_new_forward.7} parent=0 // pred_check
    _
  $region3: #{encoder_new_forward.7} parent=0 // pred_check_branch
    %14 = sbr.rel (0) target = $region5
  $region4: #{encoder_new_forward.7} parent=0 // pred_region
    _
  $region5: #{encoder_new_forward.7} parent=0 // pred_fallthru
    _
  // Predicated region
  $region6: #{encoder_new_forward.7} parent=0 // pred_check
    _
  $region7: #{encoder_new_forward.7} parent=0 // pred_check_branch
    %16 = sbr.rel (0) target = $region9
  $region8: #{encoder_new_forward.7} parent=0 // pred_region
    _
  $region9: #{encoder_new_forward.7} parent=0 // pred_fallthru
    _
  // Predicated region
  $region10: #{encoder_new_forward.7} parent=0 // pred_check
    _
  $region11: #{encoder_new_forward.7} parent=0 // pred_check_branch
    %18 = sbr.rel (0) target = $region13
  $region12: #{encoder_new_forward.7} parent=0 // pred_region
    _
  $region13: #{encoder_new_forward.7} parent=0 // pred_fallthru
    _
  // Predicated region
  $region14: #{encoder_new_forward.7} parent=0 // pred_check
    _
  $region15: #{encoder_new_forward.7} parent=0 // pred_check_branch
    %20 = sbr.rel (0) target = $region17
  $region16: #{encoder_new_forward.7} parent=0 // pred_region
    _
  $region17: #{encoder_new_forward.7} parent=0 // pred_fallthru
    _
  // Predicated region
  $region18: #{encoder_new_forward.7} parent=0 // pred_check
    _
  $region19: #{encoder_new_forward.7} parent=0 // pred_check_branch
    %22 = sbr.rel (0) target = $region21
  $region20: #{encoder_new_forward.7} parent=0 // pred_region
    _
  $region21: #{encoder_new_forward.7} parent=0 // pred_fallthru
    _
  // Predicated region
  $region22: #{encoder_new_forward.7} parent=0 // pred_check
    _
  $region23: #{encoder_new_forward.7} parent=0 // pred_check_branch
    %24 = sbr.rel (0) target = $region25
  $region24: #{encoder_new_forward.7} parent=0 // pred_region
    _
  $region25: #{encoder_new_forward.7} parent=0 // pred_fallthru
    _
  // Predicated region
  $region26: #{encoder_new_forward.7} parent=0 // pred_check
    _
  $region27: #{encoder_new_forward.7} parent=0 // pred_check_branch
    %26 = sbr.rel (0) target = $region29
  $region28: #{encoder_new_forward.7} parent=0 // pred_region
    _
  $region29: #{encoder_new_forward.7} parent=0 // pred_fallthru
    _
  // Predicated region
  $region30: #{encoder_new_forward.7} parent=0 // pred_check
    _
  $region31: #{encoder_new_forward.7} parent=0 // pred_check_branch
    %28 = sbr.rel (0) target = $region33
  $region32: #{encoder_new_forward.7} parent=0 // pred_region
    _
  $region33: #{encoder_new_forward.7} parent=0 // pred_fallthru
    _
  %v29 = vld [vmem:[%s1] sm:$0xff]
  %v30 = vld [vmem:[%s1 + $0x8] sm:$0xff]
  %v31 = vld [vmem:[%s3] sm:$0x1]
  %33 = vset.pattern.permute.xlu0 0
  %34 = vperm.xlu0 %33, %v29
  %v35 = vpop.permute.xlu0 %34
  %38 = vset.pattern.permute.xlu0 0
  %39 = vperm.xlu0 %38, %v30
  %v40 = vpop.permute.xlu0 %39
  %v43 = vlaneseq
  %v44 = vshrl.u32 %v43, 7
  %v45 = vsub.s32 0, %v44
  %v46 = vrot.slane %v31, %v45
  %v48 = vmul.f32 %v35, %v46
  %v49 = vmul.f32 %v40, %v46
  %v50 = vld [vmem:[%s4] sm:$0x1]
  %v52 = vlaneseq
  %v53 = vshrl.u32 %v52, 7
  %v54 = vsub.s32 0, %v53
  %v55 = vrot.slane %v50, %v54
  %v57 = vadd.f32 %v48, %v55
  %v58 = vadd.f32 %v49, %v55
  %v59 = vmul.f32 %v57, %v57
  %v60 = vmul.f32 %v58, %v58
  %v61 = vtanh.pop %v59
  %v62 = vtanh.pop %v60
  %v63 = vsub.f32 1.0, %v61
  %v64 = vsub.f32 1.0, %v62
  %v65 = vld [vmem:[%s5] sm:$0xff]
  %v66 = vld [vmem:[%s5 + $0x8] sm:$0xff]
  %v67 = vld [vmem:[%s6] sm:$0x1]
  %v69 = vlaneseq
  %v70 = vshrl.u32 %v69, 7
  %v71 = vsub.s32 0, %v70
  %v72 = vrot.slane %v67, %v71
  %vm74 = vcmask 130048
  %v76 = vsel %vm74, %v63, 0
  %v79 = vsel %vm74, %v64, 0
  %81 = vmatprep.subr.mxu0 0.0
  %82 = vmatpush1.msra.mxu0 %v65
  %83 = vmatprep.subr.mxu0 0.0
  %84 = vmatpush1.msra.mxu0 %v66
  %85 = vmatprep.subr.mxu0 0.0
  %86 = vmatpush1.msra.mxu0 0.0
  %87 = vmatprep.subr.mxu0 0.0
  %88 = vmatpush1.msra.mxu0 0.0
  %89 = vmatprep.subr.mxu0 0.0
  %90 = vmatpush1.msra.mxu0 0.0
  %91 = vmatprep.subr.mxu0 0.0
  %92 = vmatpush1.msra.mxu0 0.0
  %93 = vmatprep.subr.mxu0 0.0
  %94 = vmatpush1.msra.mxu0 0.0
  %95 = vmatprep.subr.mxu0 0.0
  %96 = vmatpush1.msra.mxu0 0.0
  %97 = vmatprep.subr.mxu0 0.0
  %98 = vmatpush1.msra.mxu0 0.0
  %99 = vmatprep.subr.mxu0 0.0
  %100 = vmatpush1.msra.mxu0 0.0
  %101 = vmatprep.subr.mxu0 0.0
  %102 = vmatpush1.msra.mxu0 0.0
  %103 = vmatprep.subr.mxu0 0.0
  %104 = vmatpush1.msra.mxu0 0.0
  %105 = vmatprep.subr.mxu0 0.0
  %106 = vmatpush1.msra.mxu0 0.0
  %107 = vmatprep.subr.mxu0 0.0
  %108 = vmatpush1.msra.mxu0 0.0
  %109 = vmatprep.subr.mxu0 0.0
  %110 = vmatpush1.msra.mxu0 0.0
  %111 = vmatprep.subr.mxu0 0.0
  %112 = vmatpush1.msra.mxu0 0.0
  %113 = vmatprep.subr.mxu0 0.0
  %114 = vmatpush1.msra.mxu0 0.0
  %115 = vmatprep.subr.mxu0 0.0
  %116 = vmatpush1.msra.mxu0 0.0
  %117 = vmatprep.subr.mxu0 0.0
  %118 = vmatpush1.msra.mxu0 0.0
  %119 = vmatprep.subr.mxu0 0.0
  %120 = vmatpush1.msra.mxu0 0.0
  %121 = vmatprep.subr.mxu0 0.0
  %122 = vmatpush1.msra.mxu0 0.0
  %123 = vmatprep.subr.mxu0 0.0
  %124 = vmatpush1.msra.mxu0 0.0
  %125 = vmatprep.subr.mxu0 0.0
  %126 = vmatpush1.msra.mxu0 0.0
  %127 = vmatprep.subr.mxu0 0.0
  %128 = vmatpush1.msra.mxu0 0.0
  %129 = vmatprep.subr.mxu0 0.0
  %130 = vmatpush1.msra.mxu0 0.0
  %131 = vmatprep.subr.mxu0 0.0
  %132 = vmatpush1.msra.mxu0 0.0
  %133 = vmatprep.subr.mxu0 0.0
  %134 = vmatpush1.msra.mxu0 0.0
  %135 = vmatprep.subr.mxu0 0.0
  %136 = vmatpush1.msra.mxu0 0.0
  %137 = vmatprep.subr.mxu0 0.0
  %138 = vmatpush1.msra.mxu0 0.0
  %139 = vmatprep.subr.mxu0 0.0
  %140 = vmatpush1.msra.mxu0 0.0
  %141 = vmatprep.subr.mxu0 0.0
  %142 = vmatpush1.msra.mxu0 0.0
  %143 = vmatprep.subr.mxu0 0.0
  %144 = vmatpush1.msra.mxu0 0.0
  %145 = vmatprep.mubr.f32.mxu0 0.0
  %146 = vmatmul.mubr.f32.gmra.mrb[0].mxu0 %v76
  %v147 = vpop.f32.mrb[0].mxu0
  %v148 = vadd.f32 %v72, %v147
  %v149 = vpop.f32.mrb[0].mxu0
  %150 = vmatprep.mubr.f32.mxu0 0.0
  %151 = vmatmul.mubr.f32.gmra.mrb[0].mxu0 %v79
  %v152 = vpop.f32.mrb[0].mxu0
  %v153 = vadd.f32 %v72, %v152
  %v154 = vpop.f32.mrb[0].mxu0
  %155 = vdwg.mxu0
  %v156 = vld [vmem:[%s0] sm:$0xff]
  %v157 = vld [vmem:[%s0 + $0x8] sm:$0xff]
  %v158 = vld [vmem:[%s7] sm:$0x1]
  %v160 = vlaneseq
  %v161 = vshrl.u32 %v160, 7
  %v162 = vsub.s32 0, %v161
  %v163 = vrot.slane %v158, %v162
  %v165 = vadd.f32 %v156, %v163
  %v166 = vadd.f32 %v157, %v163
  %v167 = vadd.f32 %v165, %v148
  %v168 = vadd.f32 %v166, %v153
  %v169 = vld [vmem:[%s2] sm:$0xff]
  %v170 = vld [vmem:[%s2 + $0x8] sm:$0xff]
  %v171 = vadd.f32 %v167, %v169
  %v172 = vadd.f32 %v168, %v170
  %vm173 = vcmask 261120
  %174 = vst.msk [vmem:[%s8] sm:$0xff] %vm173, %v171
  %175 = vst.msk [vmem:[%s8 + $0x8] sm:$0xff] %vm173, %v172
  // Predicated region
  $region34: #{encoder_new_forward.7} parent=0 // pred_check
    _
  $region35: #{encoder_new_forward.7} parent=0 // pred_check_branch
    %177 = sbr.rel (0) target = $region37
  $region36: #{encoder_new_forward.7} parent=0 // pred_region
    _
  $region37: #{encoder_new_forward.7} parent=0 // pred_fallthru
    _
  // Predicated region
  $region38: #{encoder_new_forward.7} parent=0 // pred_check
    _
  $region39: #{encoder_new_forward.7} parent=0 // pred_check_branch
    %179 = sbr.rel (0) target = $region41
  $region40: #{encoder_new_forward.7} parent=0 // pred_region
    _
  $region41: #{encoder_new_forward.7} parent=0 // pred_fallthru
    _

// kernel: encoder_new_forward.9
$region0: #{encoder_new_forward.9}
  #allocation0 [shape = 'u32[]', space=smem, size = 0x4, offset = 0x4, fixed_abs, tag = 'smem constant byte address 0x4 - core index']
  #allocation1 [shape = 'u32[144,128]{1,0:T(1,128)}', space=vmem, size = 0x12000, scoped, tag = 'internal scratch']
  %s0 = inlined_call_operand.vmem [shape: bf16[8,8,8], index: 0, kind: input, shape index: {}]
  %s1 = inlined_call_operand.vmem [shape: bf16[8,8,8], index: 1, kind: input, shape index: {}]
  %s2 = inlined_call_operand.vmem [shape: bf16[8,8,8], index: 2, kind: input, shape index: {}]
  %s3 = inlined_call_operand.vmem [shape: f32[8,1,8], index: 3, kind: input, shape index: {}]
  %s4 = inlined_call_operand.vmem [shape: bf16[8,8,8], index: 4, kind: output, shape index: {}]
  %s5 = sld [smem:[#allocation0]]
  $region49: #{encoder_new_forward.9} parent=0
    _
  %s7 = ssub.s32 1, %s5
  %s8 = scalar_select 0, %s7, %s5
  loop: start=0, step=1, limit=10
  $region2: #{encoder_new_forward.9} parent=0 // loop_pre_header
    _
  $region3: #{encoder_new_forward.9} parent=0 // loop_header
    %s10 = sphi 0, %s14
    %p11 = scmp.ge.s32.totalorder %s10, 10
    %s17 = sphi 0, %s29
    %s18 = sphi 0, %s25
    %s19 = sphi 0, %s17
    %s20 = sphi 0, %s18
    %s21 = sphi 0, %s19
    %s22 = sphi 0, %s20
    %s34 = sphi 0, %s36
    %s37 = sphi 0, %s34
    %s38 = sphi 0, %s37
    %s54 = sphi 0, %s38
    %s60 = sphi 0, %s62
    %s63 = sphi 0, %s60
    %s64 = sphi 0, %s63
    %s80 = sphi 0, %s64
    %s86 = sphi 0, %s88
    %s89 = sphi 0, %s86
    %s90 = sphi 0, %s89
    %s106 = sphi 0, %s90
    %s112 = sphi 0, %s114
    %s115 = sphi 0, %s112
    %s116 = sphi 0, %s115
    %s132 = sphi 0, %s116
    %s140 = sphi 0, %s142
    %s143 = sphi 0, %s140
    %s144 = sphi 0, %s143
    %s160 = sphi 0, %s144
  $region4: #{encoder_new_forward.9} parent=0 // loop_header_branch
    %13 = sbr.rel (%p11) target = $region8
  $region5: #{encoder_new_forward.9} parent=0 // loop_body
    %s15 = ssub.s32 %s10, 1
    %s16 = ssub.s32 %s10, 2
    %s23 = sadd.s32 1, %s18
    %p24 = scmp.ge.s32.totalorder %s23, 1
    %s25 = scalar_select %p24, 0, %s23
    %s26 = sadd.s32 1, %s17
    %s27 = scalar_select %p24, %s26, %s17
    %p28 = scmp.ge.s32.totalorder %s27, 8
    %s29 = scalar_select %p28, 0, %s27
    %s30 = ssub.s32 %s17, %s29
    %s31 = ssub.s32 %s18, %s25
    %s32 = sor.u32 %s30, %s31
    %p33 = scmp.eq.s32.totalorder %s32, 0
    %s35 = sadd.s32 %s34, 1
    %s36 = scalar_select %p33, %s34, %s35
    %p39 = pneg %p33
    %p40 = scmp.eq.s32.totalorder %s10, 7
    %p41 = por %p39, %p40
    %p42 = scmp.ne.s32.totalorder %s34, %s37
    %p43 = scmp.eq.s32.totalorder %s10, 0
    %p44 = por %p42, %p43
    %p45 = scmp.ne.s32.totalorder %s34, %s37
    %p46 = scmp.eq.s32.totalorder %s15, 7
    %p47 = por %p45, %p46
    %p48 = scmp.ne.s32.totalorder %s37, %s38
    %p49 = scmp.eq.s32.totalorder %s15, 0
    %p50 = por %p48, %p49
    %p51 = scmp.ne.s32.totalorder %s37, %s38
    %p52 = scmp.eq.s32.totalorder %s16, 7
    %p53 = por %p51, %p52
    %p55 = scmp.ne.s32.totalorder %s38, %s54
    %p56 = scmp.eq.s32.totalorder %s16, 0
    %p57 = por %p55, %p56
    %s58 = ssub.s32 %s17, %s29
    %p59 = scmp.eq.s32.totalorder %s58, 0
    %s61 = sadd.s32 %s60, 1
    %s62 = scalar_select %p59, %s60, %s61
    %p65 = pneg %p59
    %p66 = scmp.eq.s32.totalorder %s10, 7
    %p67 = por %p65, %p66
    %p68 = scmp.ne.s32.totalorder %s60, %s63
    %p69 = scmp.eq.s32.totalorder %s10, 0
    %p70 = por %p68, %p69
    %p71 = scmp.ne.s32.totalorder %s60, %s63
    %p72 = scmp.eq.s32.totalorder %s15, 7
    %p73 = por %p71, %p72
    %p74 = scmp.ne.s32.totalorder %s63, %s64
    %p75 = scmp.eq.s32.totalorder %s15, 0
    %p76 = por %p74, %p75
    %p77 = scmp.ne.s32.totalorder %s63, %s64
    %p78 = scmp.eq.s32.totalorder %s16, 7
    %p79 = por %p77, %p78
    %p81 = scmp.ne.s32.totalorder %s64, %s80
    %p82 = scmp.eq.s32.totalorder %s16, 0
    %p83 = por %p81, %p82
    %s84 = ssub.s32 %s17, %s29
    %p85 = scmp.eq.s32.totalorder %s84, 0
    %s87 = sadd.s32 %s86, 1
    %s88 = scalar_select %p85, %s86, %s87
    %p91 = pneg %p85
    %p92 = scmp.eq.s32.totalorder %s10, 7
    %p93 = por %p91, %p92
    %p94 = scmp.ne.s32.totalorder %s86, %s89
    %p95 = scmp.eq.s32.totalorder %s10, 0
    %p96 = por %p94, %p95
    %p97 = scmp.ne.s32.totalorder %s86, %s89
    %p98 = scmp.eq.s32.totalorder %s15, 7
    %p99 = por %p97, %p98
    %p100 = scmp.ne.s32.totalorder %s89, %s90
    %p101 = scmp.eq.s32.totalorder %s15, 0
    %p102 = por %p100, %p101
    %p103 = scmp.ne.s32.totalorder %s89, %s90
    %p104 = scmp.eq.s32.totalorder %s16, 7
    %p105 = por %p103, %p104
    %p107 = scmp.ne.s32.totalorder %s90, %s106
    %p108 = scmp.eq.s32.totalorder %s16, 0
    %p109 = por %p107, %p108
    %s110 = ssub.s32 %s17, %s29
    %p111 = scmp.eq.s32.totalorder %s110, 0
    %s113 = sadd.s32 %s112, 1
    %s114 = scalar_select %p111, %s112, %s113
    %p117 = pneg %p111
    %p118 = scmp.eq.s32.totalorder %s10, 7
    %p119 = por %p117, %p118
    %p120 = scmp.ne.s32.totalorder %s112, %s115
    %p121 = scmp.eq.s32.totalorder %s10, 0
    %p122 = por %p120, %p121
    %p123 = scmp.ne.s32.totalorder %s112, %s115
    %p124 = scmp.eq.s32.totalorder %s15, 7
    %p125 = por %p123, %p124
    %p126 = scmp.ne.s32.totalorder %s115, %s116
    %p127 = scmp.eq.s32.totalorder %s15, 0
    %p128 = por %p126, %p127
    %p129 = scmp.ne.s32.totalorder %s115, %s116
    %p130 = scmp.eq.s32.totalorder %s16, 7
    %p131 = por %p129, %p130
    %p133 = scmp.ne.s32.totalorder %s116, %s132
    %p134 = scmp.eq.s32.totalorder %s16, 0
    %p135 = por %p133, %p134
    %s136 = ssub.s32 %s17, %s29
    %s137 = ssub.s32 %s18, %s25
    %s138 = sor.u32 %s136, %s137
    %p139 = scmp.eq.s32.totalorder %s138, 0
    %s141 = sadd.s32 %s140, 1
    %s142 = scalar_select %p139, %s140, %s141
    %p145 = pneg %p139
    %p146 = scmp.eq.s32.totalorder %s10, 7
    %p147 = por %p145, %p146
    %p148 = scmp.ne.s32.totalorder %s140, %s143
    %p149 = scmp.eq.s32.totalorder %s10, 0
    %p150 = por %p148, %p149
    %p151 = scmp.ne.s32.totalorder %s140, %s143
    %p152 = scmp.eq.s32.totalorder %s15, 7
    %p153 = por %p151, %p152
    %p154 = scmp.ne.s32.totalorder %s143, %s144
    %p155 = scmp.eq.s32.totalorder %s15, 0
    %p156 = por %p154, %p155
    %p157 = scmp.ne.s32.totalorder %s143, %s144
    %p158 = scmp.eq.s32.totalorder %s16, 7
    %p159 = por %p157, %p158
    %p161 = scmp.ne.s32.totalorder %s144, %s160
    %p162 = scmp.eq.s32.totalorder %s16, 0
    %p163 = por %p161, %p162
    %p164 = scmp.le.s32.totalorder 1, %s10
    %p165 = scmp.lt.s32.totalorder %s10, 9
    %p166 = pnand %p164, %p165
    %p167 = pneg %p166
    // Predicated region
    $region9: #{encoder_new_forward.9} parent=5 // pred_check
      _
    $region10: #{encoder_new_forward.9} parent=5 // pred_check_branch
      %169 = sbr.rel (%p166) target = $region12
    $region11: #{encoder_new_forward.9} parent=5 // pred_region
      %s170 = ssub.s32 %s10, 1
    $region12: #{encoder_new_forward.9} parent=5 // pred_fallthru
      _
    %p171 = scmp.lt.s32.totalorder %s10, 8
    // Predicated region
    $region13: #{encoder_new_forward.9} parent=5 // pred_check
      %p172 = pneg %p171
    $region14: #{encoder_new_forward.9} parent=5 // pred_check_branch
      %174 = sbr.rel (%p172) target = $region16
    $region15: #{encoder_new_forward.9} parent=5 // pred_region
      // Predicated region
      $region17: #{encoder_new_forward.9} parent=15 // pred_check
        %p175 = pneg %p44
      $region18: #{encoder_new_forward.9} parent=15 // pred_check_branch
        %177 = sbr.rel (%p175) target = $region20
      $region19: #{encoder_new_forward.9} parent=15 // pred_region
        %p178 = scmp.lt.s32.totalorder %s17, 7
        %s179 = scalar_select %p178, %s17, 7
        %p180 = scmp.lt.s32.totalorder %s18, 0
        %s181 = scalar_select %p180, %s18, 0
        %s182 = sadd.s32 %s181, %s179
        %s183 = smul.addr %s182, 4
        %s184 = scalar_lea.vmem %s0, %s183
      $region20: #{encoder_new_forward.9} parent=15 // pred_fallthru
        _
      // Predicated region
      $region21: #{encoder_new_forward.9} parent=15 // pred_check
        %p185 = pneg %p70
      $region22: #{encoder_new_forward.9} parent=15 // pred_check_branch
        %187 = sbr.rel (%p185) target = $region24
      $region23: #{encoder_new_forward.9} parent=15 // pred_region
        %p188 = scmp.lt.s32.totalorder %s17, 7
        %s189 = scalar_select %p188, %s17, 7
        %s190 = smul.addr %s189, 4
        %s191 = scalar_lea.vmem %s1, %s190
      $region24: #{encoder_new_forward.9} parent=15 // pred_fallthru
        _
      // Predicated region
      $region25: #{encoder_new_forward.9} parent=15 // pred_check
        %p192 = pneg %p96
      $region26: #{encoder_new_forward.9} parent=15 // pred_check_branch
        %194 = sbr.rel (%p192) target = $region28
      $region27: #{encoder_new_forward.9} parent=15 // pred_region
        %p195 = scmp.lt.s32.totalorder %s17, 7
        %s196 = scalar_select %p195, %s17, 7
        %s197 = smul.addr %s196, 4
        %s198 = scalar_lea.vmem %s2, %s197
      $region28: #{encoder_new_forward.9} parent=15 // pred_fallthru
        _
      // Predicated region
      $region29: #{encoder_new_forward.9} parent=15 // pred_check
        %p199 = pneg %p122
      $region30: #{encoder_new_forward.9} parent=15 // pred_check_branch
        %201 = sbr.rel (%p199) target = $region32
      $region31: #{encoder_new_forward.9} parent=15 // pred_region
        %p202 = scmp.lt.s32.totalorder %s17, 7
        %s203 = scalar_select %p202, %s17, 7
        %s204 = scalar_lea.vmem %s3, %s203
      $region32: #{encoder_new_forward.9} parent=15 // pred_fallthru
        _
    $region16: #{encoder_new_forward.9} parent=5 // pred_fallthru
      _
    %p205 = scmp.le.s32.totalorder 1, %s10
    %p206 = scmp.lt.s32.totalorder %s10, 9
    %p207 = pnand %p205, %p206
    %p208 = pneg %p207
    // Predicated region
    $region33: #{encoder_new_forward.9} parent=5 // pred_check
      _
    $region34: #{encoder_new_forward.9} parent=5 // pred_check_branch
      %210 = sbr.rel (%p207) target = $region36
    $region35: #{encoder_new_forward.9} parent=5 // pred_region
      %s211 = ssub.s32 %s10, 1
      %p212 = scmp.lt.s32.totalorder %s19, 7
      %s213 = scalar_select %p212, %s19, 7
      %p214 = scmp.lt.s32.totalorder %s20, 0
      %s215 = scalar_select %p214, %s20, 0
      %s216 = sadd.s32 %s215, %s213
      %s217 = smul.addr %s216, 4
      %s218 = scalar_lea.vmem %s0, %s217
      %p219 = pneg %p50
      %p220 = pneg %p47
      %p221 = scmp.lt.s32.totalorder %s19, 7
      %s222 = scalar_select %p221, %s19, 7
      %s223 = smul.addr %s222, 4
      %s224 = scalar_lea.vmem %s1, %s223
      %p225 = pneg %p76
      %p226 = pneg %p73
      %p227 = scmp.lt.s32.totalorder %s19, 7
      %s228 = scalar_select %p227, %s19, 7
      %s229 = smul.addr %s228, 4
      %s230 = scalar_lea.vmem %s2, %s229
      %p231 = pneg %p102
      %p232 = pneg %p99
      %p233 = scmp.lt.s32.totalorder %s19, 7
      %s234 = scalar_select %p233, %s19, 7
      %s235 = scalar_lea.vmem %s3, %s234
      %p236 = pneg %p128
      %p237 = pneg %p125
      %p238 = pneg %p156
      %p239 = pneg %p153
      %p240 = scmp.lt.s32.totalorder %s19, 7
      %s241 = scalar_select %p240, %s19, 7
      %p242 = scmp.lt.s32.totalorder %s20, 0
      %s243 = scalar_select %p242, %s20, 0
      %s244 = sadd.s32 %s243, %s241
      %s245 = smul.addr %s244, 4
      %s246 = scalar_lea.vmem %s4, %s245
      %p247 = scmp.lt.s32.totalorder %s19, 7
      %s248 = scalar_select %p247, %s19, 7
      %p249 = scmp.lt.s32.totalorder %s20, 0
      %s250 = scalar_select %p249, %s20, 0
      %s251 = sadd.s32 %s250, %s248
      %s252 = smul.addr %s251, 4
      %s253 = scalar_lea.vmem %s0, %s252
      %p254 = scmp.lt.s32.totalorder %s19, 7
      %s255 = scalar_select %p254, %s19, 7
      %s256 = smul.addr %s255, 4
      %s257 = scalar_lea.vmem %s1, %s256
      %p258 = scmp.lt.s32.totalorder %s19, 7
      %s259 = scalar_select %p258, %s19, 7
      %s260 = smul.addr %s259, 4
      %s261 = scalar_lea.vmem %s2, %s260
      %p262 = scmp.lt.s32.totalorder %s19, 7
      %s263 = scalar_select %p262, %s19, 7
      %s264 = scalar_lea.vmem %s3, %s263
      %p265 = scmp.lt.s32.totalorder %s19, 7
      %s266 = scalar_select %p265, %s19, 7
      %p267 = scmp.lt.s32.totalorder %s20, 0
      %s268 = scalar_select %p267, %s20, 0
      %s269 = sadd.s32 %s268, %s266
      %s270 = smul.addr %s269, 4
      %s271 = scalar_lea.vmem %s4, %s270
      %v273 = vld [vmem:[%s253] sm:$0xf]
      %v274 = vld [vmem:[%s257] sm:$0xf]
      %v275 = vld [vmem:[%s261] sm:$0xf]
      %v276 = vld [vmem:[%s264] sm:$0x1]
      %v278 = vlaneseq
      %v279 = vshrl.u32 %v278, 7
      %v280 = vsub.s32 0, %v279
      %v281 = vrot.slane %v276, %v280
      %vm283 = vcmask 64512
      %v285 = vsel %vm283, %v273, 0
      %v288 = vsel %vm283, %v274, 0
      %290 = vmatprep.subr.bf16.mxu0 0
      %291 = vmatpush1.bf16.xpose.msra.mxu0 %v288
      %292 = vmatprep.subr.bf16.mxu0 0
      %293 = vmatpush1.bf16.xpose.msra.mxu0 0
      %294 = vmatprep.subr.bf16.mxu0 0
      %295 = vmatpush1.bf16.xpose.msra.mxu0 0
      %296 = vmatprep.subr.bf16.mxu0 0
      %297 = vmatpush1.bf16.xpose.msra.mxu0 0
      %298 = vmatprep.subr.bf16.mxu0 0
      %299 = vmatpush1.bf16.xpose.msra.mxu0 0
      %300 = vmatprep.subr.bf16.mxu0 0
      %301 = vmatpush1.bf16.xpose.msra.mxu0 0
      %302 = vmatprep.subr.bf16.mxu0 0
      %303 = vmatpush1.bf16.xpose.msra.mxu0 0
      %304 = vmatprep.subr.bf16.mxu0 0
      %305 = vmatpush1.bf16.xpose.msra.mxu0 0
      %306 = vmatprep.subr.bf16.mxu0 0
      %307 = vmatpush1.bf16.xpose.msra.mxu0 0
      %308 = vmatprep.subr.bf16.mxu0 0
      %309 = vmatpush1.bf16.xpose.msra.mxu0 0
      %310 = vmatprep.subr.bf16.mxu0 0
      %311 = vmatpush1.bf16.xpose.msra.mxu0 0
      %312 = vmatprep.subr.bf16.mxu0 0
      %313 = vmatpush1.bf16.xpose.msra.mxu0 0
      %314 = vmatprep.subr.bf16.mxu0 0
      %315 = vmatpush1.bf16.xpose.msra.mxu0 0
      %316 = vmatprep.subr.bf16.mxu0 0
      %317 = vmatpush1.bf16.xpose.msra.mxu0 0
      %318 = vmatprep.subr.bf16.mxu0 0
      %319 = vmatpush1.bf16.xpose.msra.mxu0 0
      %320 = vmatprep.subr.bf16.mxu0 0
      %321 = vmatpush1.bf16.xpose.msra.mxu0 0
      %322 = vmatprep.mubr.bf16.mxu0 0
      %323 = vmatmul.mubr.bf16.gmra.mrb[0].mxu0 %v285
      %v324 = vpop.f32.mrb[0].mxu0
      %v325 = vadd.f32 %v281, %v324
      %v326 = vpop.f32.mrb[0].mxu0
      %v327 = vpop.f32.mrb[0].mxu0
      %v328 = vpop.f32.mrb[0].mxu0
      %329 = vdwg.mxu0
      %v330 = vsel %vm283, %v325, -inf
      %331 = vmax.xlane.f32.xlu0 %v330
      %v332 = vpop.xlane.xlu0 %331
      %v333 = vsub.f32 %v325, %v332
      %v334 = vmul.f32 %v333, 1.442695
      %v335 = vpow.pop %v334
      %v336 = vsel %vm283, %v335, 0.0
      %337 = vadd.xlane.f32.xlu0 %v336
      %v338 = vpop.xlane.xlu0 %337
      %v339 = vrcp.pop %v338
      %v340 = vmul.f32 %v335, %v339
      %v341 = vpack.c.bf16 %v340, %v340
      %v343 = vsel %vm283, %v341, 0
      %vm345 = vcmask 1043456
      %v347 = vsel %vm345, %v275, 0
      %349 = vmatprep.subr.bf16.mxu0 0
      %350 = vmatpush1.bf16.msra.mxu0 %v347
      %351 = vmatprep.subr.bf16.mxu0 0
      %352 = vmatpush1.bf16.msra.mxu0 0
      %353 = vmatprep.subr.bf16.mxu0 0
      %354 = vmatpush1.bf16.msra.mxu0 0
      %355 = vmatprep.subr.bf16.mxu0 0
      %356 = vmatpush1.bf16.msra.mxu0 0
      %357 = vmatprep.subr.bf16.mxu0 0
      %358 = vmatpush1.bf16.msra.mxu0 0
      %359 = vmatprep.subr.bf16.mxu0 0
      %360 = vmatpush1.bf16.msra.mxu0 0
      %361 = vmatprep.subr.bf16.mxu0 0
      %362 = vmatpush1.bf16.msra.mxu0 0
      %363 = vmatprep.subr.bf16.mxu0 0
      %364 = vmatpush1.bf16.msra.mxu0 0
      %365 = vmatprep.subr.bf16.mxu0 0
      %366 = vmatpush1.bf16.msra.mxu0 0
      %367 = vmatprep.subr.bf16.mxu0 0
      %368 = vmatpush1.bf16.msra.mxu0 0
      %369 = vmatprep.subr.bf16.mxu0 0
      %370 = vmatpush1.bf16.msra.mxu0 0
      %371 = vmatprep.subr.bf16.mxu0 0
      %372 = vmatpush1.bf16.msra.mxu0 0
      %373 = vmatprep.subr.bf16.mxu0 0
      %374 = vmatpush1.bf16.msra.mxu0 0
      %375 = vmatprep.subr.bf16.mxu0 0
      %376 = vmatpush1.bf16.msra.mxu0 0
      %377 = vmatprep.subr.bf16.mxu0 0
      %378 = vmatpush1.bf16.msra.mxu0 0
      %379 = vmatprep.subr.bf16.mxu0 0
      %380 = vmatpush1.bf16.msra.mxu0 0
      %381 = vmatprep.mubr.bf16.mxu0 0
      %382 = vmatmul.mubr.bf16.gmra.mrb[0].mxu0 %v343
      %v383 = vpop.f32.mrb[0].mxu0
      %v384 = vadd.f32 0.0, %v383
      %v385 = vpop.f32.mrb[0].mxu0
      %v386 = vpop.f32.mrb[0].mxu0
      %v387 = vpop.f32.mrb[0].mxu0
      %388 = vdwg.mxu0
      %v389 = vpack.c.bf16 %v384, %v384
      %vm390 = vcmask 60416
      %391 = vst.msk [vmem:[%s271] sm:$0xf] %vm390, %v389
      %p392 = scmp.lt.s32.totalorder %s19, 7
      %s393 = scalar_select %p392, %s19, 7
      %p394 = scmp.lt.s32.totalorder %s20, 0
      %s395 = scalar_select %p394, %s20, 0
      %s396 = sadd.s32 %s395, %s393
      %s397 = smul.addr %s396, 4
      %s398 = scalar_lea.vmem %s4, %s397
      // Predicated region
      $region37: #{encoder_new_forward.9} parent=35 // pred_check
        %p399 = pneg %p153
      $region38: #{encoder_new_forward.9} parent=35 // pred_check_branch
        %401 = sbr.rel (%p399) target = $region40
      $region39: #{encoder_new_forward.9} parent=35 // pred_region
        _
      $region40: #{encoder_new_forward.9} parent=35 // pred_fallthru
        _
    $region36: #{encoder_new_forward.9} parent=5 // pred_fallthru
      _
    %p402 = scmp.le.s32.totalorder 2, %s10
    // Predicated region
    $region41: #{encoder_new_forward.9} parent=5 // pred_check
      %p403 = pneg %p402
    $region42: #{encoder_new_forward.9} parent=5 // pred_check_branch
      %405 = sbr.rel (%p403) target = $region44
    $region43: #{encoder_new_forward.9} parent=5 // pred_region
      %s406 = ssub.s32 %s10, 2
      // Predicated region
      $region45: #{encoder_new_forward.9} parent=43 // pred_check
        %p407 = pneg %p159
      $region46: #{encoder_new_forward.9} parent=43 // pred_check_branch
        %409 = sbr.rel (%p407) target = $region48
      $region47: #{encoder_new_forward.9} parent=43 // pred_region
        %p410 = scmp.lt.s32.totalorder %s21, 7
        %s411 = scalar_select %p410, %s21, 7
        %p412 = scmp.lt.s32.totalorder %s22, 0
        %s413 = scalar_select %p412, %s22, 0
        %s414 = sadd.s32 %s413, %s411
        %s415 = smul.addr %s414, 4
        %s416 = scalar_lea.vmem %s4, %s415
      $region48: #{encoder_new_forward.9} parent=43 // pred_fallthru
        _
    $region44: #{encoder_new_forward.9} parent=5 // pred_fallthru
      _
  $region6: #{encoder_new_forward.9} parent=0 // loop_footer
    %s14 = sadd.s32 1, %s10
  $region7: #{encoder_new_forward.9} parent=0 // loop_footer_branch
    %9 = sbr.rel target = $region3
  $region8: #{encoder_new_forward.9} parent=0 // loop_exit
    _

// kernel: encoder_new_forward.10
$region0: #{encoder_new_forward.10}
  #allocation0 [shape = 'u32[]', space=smem, size = 0x4, offset = 0x4, fixed_abs, tag = 'smem constant byte address 0x4 - core index']
  #allocation1 [shape = 'u32[144,128]{1,0:T(1,128)}', space=vmem, size = 0x12000, scoped, tag = 'internal scratch']
  #allocation2 [shape = 'f32[16,32]{1,0:T(8,128)}', space=vmem, size = 0x2000, scoped, tag = 'scratch operand']
  #allocation3 [shape = 'f32[16,32]{1,0:T(8,128)}', space=vmem, size = 0x2000, scoped, tag = 'scratch operand']
  %s0 = inlined_call_operand.vmem [shape: bf16[16,32], index: 0, kind: input, shape index: {}]
  %s1 = inlined_call_operand.vmem [shape: f32[16,32], index: 1, kind: input, shape index: {}]
  %s2 = inlined_call_operand.vmem [shape: bf16[32,32], index: 2, kind: input, shape index: {}]
  %s3 = inlined_call_operand.vmem [shape: f32[1,32], index: 3, kind: input, shape index: {}]
  %s4 = inlined_call_operand.vmem [shape: f32[1,32], index: 4, kind: input, shape index: {}, may-alias: {4,10}]
  %s5 = inlined_call_operand.vmem [shape: f32[1,32], index: 5, kind: input, shape index: {}, may-alias: {5,11}]
  %s6 = inlined_call_operand.vmem [shape: bf16[32,64], index: 6, kind: input, shape index: {}]
  %s7 = inlined_call_operand.vmem [shape: f32[1,64], index: 7, kind: input, shape index: {}]
  %s8 = inlined_call_operand.vmem [shape: bf16[64,32], index: 8, kind: input, shape index: {}]
  %s9 = inlined_call_operand.vmem [shape: f32[1,32], index: 9, kind: input, shape index: {}]
  %s10 = inlined_call_operand.vmem [shape: f32[1,32], index: 10, kind: input, shape index: {}, may-alias: {4,10}]
  %s11 = inlined_call_operand.vmem [shape: f32[1,32], index: 11, kind: input, shape index: {}, may-alias: {5,11}]
  %s12 = inlined_call_operand.vmem [shape: f32[16,32], index: 12, kind: output, shape index: {}]
  %s13 = sld [smem:[#allocation0]]
  $region66: #{encoder_new_forward.10} parent=0
    _
  %s15 = ssub.s32 1, %s13
  %s16 = scalar_select 0, %s15, %s13
  // Predicated region
  $region2: #{encoder_new_forward.10} parent=0 // pred_check
    _
  $region3: #{encoder_new_forward.10} parent=0 // pred_check_branch
    %18 = sbr.rel (0) target = $region5
  $region4: #{encoder_new_forward.10} parent=0 // pred_region
    _
  $region5: #{encoder_new_forward.10} parent=0 // pred_fallthru
    _
  // Predicated region
  $region6: #{encoder_new_forward.10} parent=0 // pred_check
    _
  $region7: #{encoder_new_forward.10} parent=0 // pred_check_branch
    %20 = sbr.rel (0) target = $region9
  $region8: #{encoder_new_forward.10} parent=0 // pred_region
    _
  $region9: #{encoder_new_forward.10} parent=0 // pred_fallthru
    _
  // Predicated region
  $region10: #{encoder_new_forward.10} parent=0 // pred_check
    _
  $region11: #{encoder_new_forward.10} parent=0 // pred_check_branch
    %22 = sbr.rel (0) target = $region13
  $region12: #{encoder_new_forward.10} parent=0 // pred_region
    _
  $region13: #{encoder_new_forward.10} parent=0 // pred_fallthru
    _
  // Predicated region
  $region14: #{encoder_new_forward.10} parent=0 // pred_check
    _
  $region15: #{encoder_new_forward.10} parent=0 // pred_check_branch
    %24 = sbr.rel (0) target = $region17
  $region16: #{encoder_new_forward.10} parent=0 // pred_region
    _
  $region17: #{encoder_new_forward.10} parent=0 // pred_fallthru
    _
  // Predicated region
  $region18: #{encoder_new_forward.10} parent=0 // pred_check
    _
  $region19: #{encoder_new_forward.10} parent=0 // pred_check_branch
    %26 = sbr.rel (0) target = $region21
  $region20: #{encoder_new_forward.10} parent=0 // pred_region
    _
  $region21: #{encoder_new_forward.10} parent=0 // pred_fallthru
    _
  // Predicated region
  $region22: #{encoder_new_forward.10} parent=0 // pred_check
    _
  $region23: #{encoder_new_forward.10} parent=0 // pred_check_branch
    %28 = sbr.rel (0) target = $region25
  $region24: #{encoder_new_forward.10} parent=0 // pred_region
    _
  $region25: #{encoder_new_forward.10} parent=0 // pred_fallthru
    _
  // Predicated region
  $region26: #{encoder_new_forward.10} parent=0 // pred_check
    _
  $region27: #{encoder_new_forward.10} parent=0 // pred_check_branch
    %30 = sbr.rel (0) target = $region29
  $region28: #{encoder_new_forward.10} parent=0 // pred_region
    _
  $region29: #{encoder_new_forward.10} parent=0 // pred_fallthru
    _
  // Predicated region
  $region30: #{encoder_new_forward.10} parent=0 // pred_check
    _
  $region31: #{encoder_new_forward.10} parent=0 // pred_check_branch
    %32 = sbr.rel (0) target = $region33
  $region32: #{encoder_new_forward.10} parent=0 // pred_region
    _
  $region33: #{encoder_new_forward.10} parent=0 // pred_fallthru
    _
  // Predicated region
  $region34: #{encoder_new_forward.10} parent=0 // pred_check
    _
  $region35: #{encoder_new_forward.10} parent=0 // pred_check_branch
    %34 = sbr.rel (0) target = $region37
  $region36: #{encoder_new_forward.10} parent=0 // pred_region
    _
  $region37: #{encoder_new_forward.10} parent=0 // pred_fallthru
    _
  // Predicated region
  $region38: #{encoder_new_forward.10} parent=0 // pred_check
    _
  $region39: #{encoder_new_forward.10} parent=0 // pred_check_branch
    %36 = sbr.rel (0) target = $region41
  $region40: #{encoder_new_forward.10} parent=0 // pred_region
    _
  $region41: #{encoder_new_forward.10} parent=0 // pred_fallthru
    _
  // Predicated region
  $region42: #{encoder_new_forward.10} parent=0 // pred_check
    _
  $region43: #{encoder_new_forward.10} parent=0 // pred_check_branch
    %38 = sbr.rel (0) target = $region45
  $region44: #{encoder_new_forward.10} parent=0 // pred_region
    _
  $region45: #{encoder_new_forward.10} parent=0 // pred_fallthru
    _
  // Predicated region
  $region46: #{encoder_new_forward.10} parent=0 // pred_check
    _
  $region47: #{encoder_new_forward.10} parent=0 // pred_check_branch
    %40 = sbr.rel (0) target = $region49
  $region48: #{encoder_new_forward.10} parent=0 // pred_region
    _
  $region49: #{encoder_new_forward.10} parent=0 // pred_fallthru
    _
  %p42 = scmp.eq.s32.totalorder 0, 0
  // Predicated region
  $region50: #{encoder_new_forward.10} parent=0 // pred_check
    %p43 = pneg %p42
  $region51: #{encoder_new_forward.10} parent=0 // pred_check_branch
    %45 = sbr.rel (%p43) target = $region53
  $region52: #{encoder_new_forward.10} parent=0 // pred_region
    %v46 = vld [vmem:[%s0] sm:$0xf]
    %v47 = vld [vmem:[%s0 + $0x4] sm:$0xf]
    %v48 = vld [vmem:[%s2] sm:$0xf]
    %v49 = vld [vmem:[%s2 + $0x4] sm:$0xf]
    %v50 = vld [vmem:[%s2 + $0x8] sm:$0xf]
    %v51 = vld [vmem:[%s2 + $0xc] sm:$0xf]
    %v52 = vld [vmem:[%s3] sm:$0x1]
    %v54 = vlaneseq
    %v55 = vshrl.u32 %v54, 7
    %v56 = vsub.s32 0, %v55
    %v57 = vrot.slane %v52, %v56
    %v61 = vunpack.c.l.b16 %v46
    %v62 = vunpack.c.l.b16 %v47
    %v63 = vpack.c.b16 %v62, %v61
    %v68 = vunpack.c.l.b16 %v48
    %v69 = vunpack.c.l.b16 %v49
    %v70 = vunpack.c.l.b16 %v50
    %v71 = vunpack.c.l.b16 %v51
    %v72 = vpack.c.b16 %v69, %v68
    %v73 = vpack.c.b16 %v71, %v70
    %vm76 = vcmask 261120
    %v78 = vsel %vm76, %v63, 0
    %80 = vmatprep.subr.bf16.mxu0 0
    %81 = vmatpush1.bf16.msra.mxu0 %v72
    %82 = vmatprep.subr.bf16.mxu0 0
    %83 = vmatpush1.bf16.msra.mxu0 %v73
    %84 = vmatprep.subr.bf16.mxu0 0
    %85 = vmatpush1.bf16.msra.mxu0 0
    %86 = vmatprep.subr.bf16.mxu0 0
    %87 = vmatpush1.bf16.msra.mxu0 0
    %88 = vmatprep.subr.bf16.mxu0 0
    %89 = vmatpush1.bf16.msra.mxu0 0
    %90 = vmatprep.subr.bf16.mxu0 0
    %91 = vmatpush1.bf16.msra.mxu0 0
    %92 = vmatprep.subr.bf16.mxu0 0
    %93 = vmatpush1.bf16.msra.mxu0 0
    %94 = vmatprep.subr.bf16.mxu0 0
    %95 = vmatpush1.bf16.msra.mxu0 0
    %96 = vmatprep.subr.bf16.mxu0 0
    %97 = vmatpush1.bf16.msra.mxu0 0
    %98 = vmatprep.subr.bf16.mxu0 0
    %99 = vmatpush1.bf16.msra.mxu0 0
    %100 = vmatprep.subr.bf16.mxu0 0
    %101 = vmatpush1.bf16.msra.mxu0 0
    %102 = vmatprep.subr.bf16.mxu0 0
    %103 = vmatpush1.bf16.msra.mxu0 0
    %104 = vmatprep.subr.bf16.mxu0 0
    %105 = vmatpush1.bf16.msra.mxu0 0
    %106 = vmatprep.subr.bf16.mxu0 0
    %107 = vmatpush1.bf16.msra.mxu0 0
    %108 = vmatprep.subr.bf16.mxu0 0
    %109 = vmatpush1.bf16.msra.mxu0 0
    %110 = vmatprep.subr.bf16.mxu0 0
    %111 = vmatpush1.bf16.msra.mxu0 0
    %112 = vmatprep.mubr.bf16.mxu0 0
    %113 = vmatmul.mubr.bf16.gmra.mrb[0].mxu0 %v78
    %v114 = vpop.f32.mrb[0].mxu0
    %v115 = vadd.f32 %v57, %v114
    %v116 = vpop.f32.mrb[0].mxu0
    %v117 = vpop.f32.mrb[0].mxu0
    %v118 = vadd.f32 %v57, %v117
    %v119 = vpop.f32.mrb[0].mxu0
    %120 = vdwg.mxu0
    %v121 = vld [vmem:[%s1] sm:$0xff]
    %v122 = vld [vmem:[%s1 + $0x8] sm:$0xff]
    %v123 = vadd.f32 %v121, %v115
    %v124 = vadd.f32 %v122, %v118
    %v125 = vsel %vm76, %v123, 0.0
    %126 = vadd.xlane.f32.xlu0 %v125
    %v127 = vpop.xlane.xlu0 %126
    %v128 = vsel %vm76, %v124, 0.0
    %129 = vadd.xlane.f32.xlu0 %v128
    %v130 = vpop.xlane.xlu0 %129
    %v131 = vrcp.pop 32.0
    %v132 = vmul.f32 %v127, %v131
    %v133 = vmul.f32 %v130, %v131
    %v134 = vsub.f32 %v123, %v132
    %v135 = vsub.f32 %v124, %v133
    %v136 = vmul.f32 %v134, %v134
    %v137 = vmul.f32 %v135, %v135
    %v138 = vsel %vm76, %v136, 0.0
    %139 = vadd.xlane.f32.xlu0 %v138
    %v140 = vpop.xlane.xlu0 %139
    %v141 = vsel %vm76, %v137, 0.0
    %142 = vadd.xlane.f32.xlu0 %v141
    %v143 = vpop.xlane.xlu0 %142
    %v144 = vmul.f32 %v140, %v131
    %v145 = vmul.f32 %v143, %v131
    %v146 = vadd.f32 %v144, 1e-05
    %v147 = vadd.f32 %v145, 1e-05
    %v148 = vrsqrt.pop %v146
    %v149 = vrsqrt.pop %v147
    %v150 = vmul.f32 %v134, %v148
    %v151 = vmul.f32 %v135, %v149
    %v152 = vld [vmem:[%s4] sm:$0x1]
    %v154 = vlaneseq
    %v155 = vshrl.u32 %v154, 7
    %v156 = vsub.s32 0, %v155
    %v157 = vrot.slane %v152, %v156
    %v159 = vmul.f32 %v150, %v157
    %v160 = vmul.f32 %v151, %v157
    %v161 = vld [vmem:[%s5] sm:$0x1]
    %v163 = vlaneseq
    %v164 = vshrl.u32 %v163, 7
    %v165 = vsub.s32 0, %v164
    %v166 = vrot.slane %v161, %v165
    %v168 = vadd.f32 %v159, %v166
    %v169 = vadd.f32 %v160, %v166
    %170 = vst.msk [vmem:[#allocation2] sm:$0xff] %vm76, %v168
    %171 = vst.msk [vmem:[#allocation2 + $0x8] sm:$0xff] %vm76, %v169
    %172 = vst.msk [vmem:[#allocation3] sm:$0xff] %vm76, 0.0
    %173 = vst.msk [vmem:[#allocation3 + $0x8] sm:$0xff] %vm76, 0.0
  $region53: #{encoder_new_forward.10} parent=0 // pred_fallthru
    _
  %v174 = vld [vmem:[#allocation2] sm:$0xff]
  %v175 = vld [vmem:[#allocation2 + $0x8] sm:$0xff]
  %v176 = vpack.c.bf16 %v175, %v174
  %v177 = vld [vmem:[%s6] sm:$0xf]
  %v178 = vld [vmem:[%s6 + $0x4] sm:$0xf]
  %v179 = vld [vmem:[%s6 + $0x8] sm:$0xf]
  %v180 = vld [vmem:[%s6 + $0xc] sm:$0xf]
  %v181 = vld [vmem:[%s7] sm:$0x1]
  %v183 = vlaneseq
  %v184 = vshrl.u32 %v183, 7
  %v185 = vsub.s32 0, %v184
  %v186 = vrot.slane %v181, %v185
  %v192 = vunpack.c.l.b16 %v177
  %v193 = vunpack.c.l.b16 %v178
  %v194 = vunpack.c.l.b16 %v179
  %v195 = vunpack.c.l.b16 %v180
  %v196 = vpack.c.b16 %v193, %v192
  %v197 = vpack.c.b16 %v195, %v194
  %vm200 = vcmask 261120
  %v202 = vsel %vm200, %v176, 0
  %204 = vmatprep.subr.bf16.mxu0 0
  %205 = vmatpush1.bf16.msra.mxu0 %v196
  %206 = vmatprep.subr.bf16.mxu0 0
  %207 = vmatpush1.bf16.msra.mxu0 %v197
  %208 = vmatprep.subr.bf16.mxu0 0
  %209 = vmatpush1.bf16.msra.mxu0 0
  %210 = vmatprep.subr.bf16.mxu0 0
  %211 = vmatpush1.bf16.msra.mxu0 0
  %212 = vmatprep.subr.bf16.mxu0 0
  %213 = vmatpush1.bf16.msra.mxu0 0
  %214 = vmatprep.subr.bf16.mxu0 0
  %215 = vmatpush1.bf16.msra.mxu0 0
  %216 = vmatprep.subr.bf16.mxu0 0
  %217 = vmatpush1.bf16.msra.mxu0 0
  %218 = vmatprep.subr.bf16.mxu0 0
  %219 = vmatpush1.bf16.msra.mxu0 0
  %220 = vmatprep.subr.bf16.mxu0 0
  %221 = vmatpush1.bf16.msra.mxu0 0
  %222 = vmatprep.subr.bf16.mxu0 0
  %223 = vmatpush1.bf16.msra.mxu0 0
  %224 = vmatprep.subr.bf16.mxu0 0
  %225 = vmatpush1.bf16.msra.mxu0 0
  %226 = vmatprep.subr.bf16.mxu0 0
  %227 = vmatpush1.bf16.msra.mxu0 0
  %228 = vmatprep.subr.bf16.mxu0 0
  %229 = vmatpush1.bf16.msra.mxu0 0
  %230 = vmatprep.subr.bf16.mxu0 0
  %231 = vmatpush1.bf16.msra.mxu0 0
  %232 = vmatprep.subr.bf16.mxu0 0
  %233 = vmatpush1.bf16.msra.mxu0 0
  %234 = vmatprep.subr.bf16.mxu0 0
  %235 = vmatpush1.bf16.msra.mxu0 0
  %236 = vmatprep.mubr.bf16.mxu0 0
  %237 = vmatmul.mubr.bf16.gmra.mrb[0].mxu0 %v202
  %v238 = vpop.f32.mrb[0].mxu0
  %v239 = vadd.f32 %v186, %v238
  %v240 = vpop.f32.mrb[0].mxu0
  %v241 = vpop.f32.mrb[0].mxu0
  %v242 = vadd.f32 %v186, %v241
  %v243 = vpop.f32.mrb[0].mxu0
  %244 = vdwg.mxu0
  %v245 = vmax.f32 %v239, 0.0
  %v246 = vmax.f32 %v242, 0.0
  %v247 = vld [vmem:[#allocation3] sm:$0xff]
  %v248 = vld [vmem:[#allocation3 + $0x8] sm:$0xff]
  %v249 = vpack.c.bf16 %v246, %v245
  %v250 = vld [vmem:[%s8] sm:$0xf]
  %v251 = vld [vmem:[%s8 + $0x4] sm:$0xf]
  %v252 = vld [vmem:[%s8 + $0x8] sm:$0xf]
  %v253 = vld [vmem:[%s8 + $0xc] sm:$0xf]
  %v254 = vld [vmem:[%s8 + $0x10] sm:$0xf]
  %v255 = vld [vmem:[%s8 + $0x14] sm:$0xf]
  %v256 = vld [vmem:[%s8 + $0x18] sm:$0xf]
  %v257 = vld [vmem:[%s8 + $0x1c] sm:$0xf]
  %v266 = vunpack.c.l.b16 %v250
  %v267 = vunpack.c.l.b16 %v251
  %v268 = vunpack.c.l.b16 %v252
  %v269 = vunpack.c.l.b16 %v253
  %v270 = vunpack.c.l.b16 %v254
  %v271 = vunpack.c.l.b16 %v255
  %v272 = vunpack.c.l.b16 %v256
  %v273 = vunpack.c.l.b16 %v257
  %v274 = vpack.c.b16 %v267, %v266
  %v275 = vpack.c.b16 %v269, %v268
  %v276 = vpack.c.b16 %v271, %v270
  %v277 = vpack.c.b16 %v273, %v272
  %vm282 = vcmask 523264
  %v284 = vsel %vm282, %v249, 0
  %286 = vmatprep.subr.bf16.mxu0 0
  %287 = vmatpush1.bf16.msra.mxu0 %v274
  %288 = vmatprep.subr.bf16.mxu0 0
  %289 = vmatpush1.bf16.msra.mxu0 %v275
  %290 = vmatprep.subr.bf16.mxu0 0
  %291 = vmatpush1.bf16.msra.mxu0 %v276
  %292 = vmatprep.subr.bf16.mxu0 0
  %293 = vmatpush1.bf16.msra.mxu0 %v277
  %294 = vmatprep.subr.bf16.mxu0 0
  %295 = vmatpush1.bf16.msra.mxu0 0
  %296 = vmatprep.subr.bf16.mxu0 0
  %297 = vmatpush1.bf16.msra.mxu0 0
  %298 = vmatprep.subr.bf16.mxu0 0
  %299 = vmatpush1.bf16.msra.mxu0 0
  %300 = vmatprep.subr.bf16.mxu0 0
  %301 = vmatpush1.bf16.msra.mxu0 0
  %302 = vmatprep.subr.bf16.mxu0 0
  %303 = vmatpush1.bf16.msra.mxu0 0
  %304 = vmatprep.subr.bf16.mxu0 0
  %305 = vmatpush1.bf16.msra.mxu0 0
  %306 = vmatprep.subr.bf16.mxu0 0
  %307 = vmatpush1.bf16.msra.mxu0 0
  %308 = vmatprep.subr.bf16.mxu0 0
  %309 = vmatpush1.bf16.msra.mxu0 0
  %310 = vmatprep.subr.bf16.mxu0 0
  %311 = vmatpush1.bf16.msra.mxu0 0
  %312 = vmatprep.subr.bf16.mxu0 0
  %313 = vmatpush1.bf16.msra.mxu0 0
  %314 = vmatprep.subr.bf16.mxu0 0
  %315 = vmatpush1.bf16.msra.mxu0 0
  %316 = vmatprep.subr.bf16.mxu0 0
  %317 = vmatpush1.bf16.msra.mxu0 0
  %318 = vmatprep.mubr.bf16.mxu0 0
  %319 = vmatmul.mubr.bf16.gmra.mrb[0].mxu0 %v284
  %v320 = vpop.f32.mrb[0].mxu0
  %v321 = vadd.f32 0.0, %v320
  %v322 = vpop.f32.mrb[0].mxu0
  %v323 = vpop.f32.mrb[0].mxu0
  %v324 = vadd.f32 0.0, %v323
  %v325 = vpop.f32.mrb[0].mxu0
  %326 = vdwg.mxu0
  %v327 = vadd.f32 %v247, %v321
  %v328 = vadd.f32 %v248, %v324
  %329 = vst.msk [vmem:[#allocation3] sm:$0xff] %vm200, %v327
  %330 = vst.msk [vmem:[#allocation3 + $0x8] sm:$0xff] %vm200, %v328
  // Predicated region
  $region54: #{encoder_new_forward.10} parent=0 // pred_check
    %p331 = pneg %p42
  $region55: #{encoder_new_forward.10} parent=0 // pred_check_branch
    %333 = sbr.rel (%p331) target = $region57
  $region56: #{encoder_new_forward.10} parent=0 // pred_region
    %v334 = vld [vmem:[#allocation2] sm:$0xff]
    %v335 = vld [vmem:[#allocation2 + $0x8] sm:$0xff]
    %v336 = vld [vmem:[#allocation3] sm:$0xff]
    %v337 = vld [vmem:[#allocation3 + $0x8] sm:$0xff]
    %v338 = vadd.f32 %v334, %v336
    %v339 = vadd.f32 %v335, %v337
    %v340 = vld [vmem:[%s9] sm:$0x1]
    %v342 = vlaneseq
    %v343 = vshrl.u32 %v342, 7
    %v344 = vsub.s32 0, %v343
    %v345 = vrot.slane %v340, %v344
    %v347 = vadd.f32 %v338, %v345
    %v348 = vadd.f32 %v339, %v345
    %v349 = vsel %vm200, %v347, 0.0
    %350 = vadd.xlane.f32.xlu0 %v349
    %v351 = vpop.xlane.xlu0 %350
    %v352 = vsel %vm200, %v348, 0.0
    %353 = vadd.xlane.f32.xlu0 %v352
    %v354 = vpop.xlane.xlu0 %353
    %v355 = vrcp.pop 32.0
    %v356 = vmul.f32 %v351, %v355
    %v357 = vmul.f32 %v354, %v355
    %v358 = vsub.f32 %v347, %v356
    %v359 = vsub.f32 %v348, %v357
    %v360 = vmul.f32 %v358, %v358
    %v361 = vmul.f32 %v359, %v359
    %v362 = vsel %vm200, %v360, 0.0
    %363 = vadd.xlane.f32.xlu0 %v362
    %v364 = vpop.xlane.xlu0 %363
    %v365 = vsel %vm200, %v361, 0.0
    %366 = vadd.xlane.f32.xlu0 %v365
    %v367 = vpop.xlane.xlu0 %366
    %v368 = vmul.f32 %v364, %v355
    %v369 = vmul.f32 %v367, %v355
    %v370 = vadd.f32 %v368, 1e-05
    %v371 = vadd.f32 %v369, 1e-05
    %v372 = vrsqrt.pop %v370
    %v373 = vrsqrt.pop %v371
    %v374 = vmul.f32 %v358, %v372
    %v375 = vmul.f32 %v359, %v373
    %v376 = vld [vmem:[%s10] sm:$0x1]
    %v378 = vlaneseq
    %v379 = vshrl.u32 %v378, 7
    %v380 = vsub.s32 0, %v379
    %v381 = vrot.slane %v376, %v380
    %v383 = vmul.f32 %v374, %v381
    %v384 = vmul.f32 %v375, %v381
    %v385 = vld [vmem:[%s11] sm:$0x1]
    %v387 = vlaneseq
    %v388 = vshrl.u32 %v387, 7
    %v389 = vsub.s32 0, %v388
    %v390 = vrot.slane %v385, %v389
    %v392 = vadd.f32 %v383, %v390
    %v393 = vadd.f32 %v384, %v390
    %394 = vst.msk [vmem:[%s12] sm:$0xff] %vm200, %v392
    %395 = vst.msk [vmem:[%s12 + $0x8] sm:$0xff] %vm200, %v393
  $region57: #{encoder_new_forward.10} parent=0 // pred_fallthru
    _
  // Predicated region
  $region58: #{encoder_new_forward.10} parent=0 // pred_check
    _
  $region59: #{encoder_new_forward.10} parent=0 // pred_check_branch
    %397 = sbr.rel (0) target = $region61
  $region60: #{encoder_new_forward.10} parent=0 // pred_region
    _
  $region61: #{encoder_new_forward.10} parent=0 // pred_fallthru
    _
  // Predicated region
  $region62: #{encoder_new_forward.10} parent=0 // pred_check
    _
  $region63: #{encoder_new_forward.10} parent=0 // pred_check_branch
    %399 = sbr.rel (0) target = $region65
  $region64: #{encoder_new_forward.10} parent=0 // pred_region
    _
  $region65: #{encoder_new_forward.10} parent=0 // pred_fallthru
    _

// kernel: encoder_new_forward.13
$region0: #{encoder_new_forward.13}
  #allocation0 [shape = 'u32[]', space=smem, size = 0x4, offset = 0x4, fixed_abs, tag = 'smem constant byte address 0x4 - core index']
  #allocation1 [shape = 'u32[144,128]{1,0:T(1,128)}', space=vmem, size = 0x12000, scoped, tag = 'internal scratch']
  #allocation2 [shape = 'f32[16,32]{1,0:T(8,128)}', space=vmem, size = 0x2000, scoped, tag = 'scratch operand']
  #allocation3 [shape = 'f32[16,32]{1,0:T(8,128)}', space=vmem, size = 0x2000, scoped, tag = 'scratch operand']
  %s0 = inlined_call_operand.vmem [shape: bf16[16,32], index: 0, kind: input, shape index: {}]
  %s1 = inlined_call_operand.vmem [shape: f32[16,32], index: 1, kind: input, shape index: {}]
  %s2 = inlined_call_operand.vmem [shape: bf16[32,32], index: 2, kind: input, shape index: {}]
  %s3 = inlined_call_operand.vmem [shape: f32[1,32], index: 3, kind: input, shape index: {}]
  %s4 = inlined_call_operand.vmem [shape: f32[1,32], index: 4, kind: input, shape index: {}, may-alias: {4,10}]
  %s5 = inlined_call_operand.vmem [shape: f32[1,32], index: 5, kind: input, shape index: {}, may-alias: {5,11}]
  %s6 = inlined_call_operand.vmem [shape: bf16[32,64], index: 6, kind: input, shape index: {}]
  %s7 = inlined_call_operand.vmem [shape: f32[1,64], index: 7, kind: input, shape index: {}]
  %s8 = inlined_call_operand.vmem [shape: bf16[64,32], index: 8, kind: input, shape index: {}]
  %s9 = inlined_call_operand.vmem [shape: f32[1,32], index: 9, kind: input, shape index: {}]
  %s10 = inlined_call_operand.vmem [shape: f32[1,32], index: 10, kind: input, shape index: {}, may-alias: {4,10}]
  %s11 = inlined_call_operand.vmem [shape: f32[1,32], index: 11, kind: input, shape index: {}, may-alias: {5,11}]
  %s12 = inlined_call_operand.hbm [shape: f32[16,32], index: 12, kind: output, shape index: {}]
  %s13 = sld [smem:[#allocation0]]
  $region66: #{encoder_new_forward.13} parent=0
    _
  %s15 = ssub.s32 1, %s13
  %s16 = scalar_select 0, %s15, %s13
  $region1: #{encoder_new_forward.13} parent=0
    #allocation4 [shape = 'u8[8192]{0}', space=vmem, size = 0x2000, scoped, tag = 'output window, operand 0, single buffered']
    #allocation5 [shape = 's32[1]{0}', space=sflag, size = 0x4, scoped, tag = 'scoped memory for encoder_new_forward.13']
    %17 = vsyncpa [#allocation5], 0
    // Predicated region
    $region2: #{encoder_new_forward.13} parent=1 // pred_check
      _
    $region3: #{encoder_new_forward.13} parent=1 // pred_check_branch
      %19 = sbr.rel (0) target = $region5
    $region4: #{encoder_new_forward.13} parent=1 // pred_region
      _
    $region5: #{encoder_new_forward.13} parent=1 // pred_fallthru
      _
    // Predicated region
    $region6: #{encoder_new_forward.13} parent=1 // pred_check
      _
    $region7: #{encoder_new_forward.13} parent=1 // pred_check_branch
      %21 = sbr.rel (0) target = $region9
    $region8: #{encoder_new_forward.13} parent=1 // pred_region
      _
    $region9: #{encoder_new_forward.13} parent=1 // pred_fallthru
      _
    // Predicated region
    $region10: #{encoder_new_forward.13} parent=1 // pred_check
      _
    $region11: #{encoder_new_forward.13} parent=1 // pred_check_branch
      %23 = sbr.rel (0) target = $region13
    $region12: #{encoder_new_forward.13} parent=1 // pred_region
      _
    $region13: #{encoder_new_forward.13} parent=1 // pred_fallthru
      _
    // Predicated region
    $region14: #{encoder_new_forward.13} parent=1 // pred_check
      _
    $region15: #{encoder_new_forward.13} parent=1 // pred_check_branch
      %25 = sbr.rel (0) target = $region17
    $region16: #{encoder_new_forward.13} parent=1 // pred_region
      _
    $region17: #{encoder_new_forward.13} parent=1 // pred_fallthru
      _
    // Predicated region
    $region18: #{encoder_new_forward.13} parent=1 // pred_check
      _
    $region19: #{encoder_new_forward.13} parent=1 // pred_check_branch
      %27 = sbr.rel (0) target = $region21
    $region20: #{encoder_new_forward.13} parent=1 // pred_region
      _
    $region21: #{encoder_new_forward.13} parent=1 // pred_fallthru
      _
    // Predicated region
    $region22: #{encoder_new_forward.13} parent=1 // pred_check
      _
    $region23: #{encoder_new_forward.13} parent=1 // pred_check_branch
      %29 = sbr.rel (0) target = $region25
    $region24: #{encoder_new_forward.13} parent=1 // pred_region
      _
    $region25: #{encoder_new_forward.13} parent=1 // pred_fallthru
      _
    // Predicated region
    $region26: #{encoder_new_forward.13} parent=1 // pred_check
      _
    $region27: #{encoder_new_forward.13} parent=1 // pred_check_branch
      %31 = sbr.rel (0) target = $region29
    $region28: #{encoder_new_forward.13} parent=1 // pred_region
      _
    $region29: #{encoder_new_forward.13} parent=1 // pred_fallthru
      _
    // Predicated region
    $region30: #{encoder_new_forward.13} parent=1 // pred_check
      _
    $region31: #{encoder_new_forward.13} parent=1 // pred_check_branch
      %33 = sbr.rel (0) target = $region33
    $region32: #{encoder_new_forward.13} parent=1 // pred_region
      _
    $region33: #{encoder_new_forward.13} parent=1 // pred_fallthru
      _
    // Predicated region
    $region34: #{encoder_new_forward.13} parent=1 // pred_check
      _
    $region35: #{encoder_new_forward.13} parent=1 // pred_check_branch
      %35 = sbr.rel (0) target = $region37
    $region36: #{encoder_new_forward.13} parent=1 // pred_region
      _
    $region37: #{encoder_new_forward.13} parent=1 // pred_fallthru
      _
    // Predicated region
    $region38: #{encoder_new_forward.13} parent=1 // pred_check
      _
    $region39: #{encoder_new_forward.13} parent=1 // pred_check_branch
      %37 = sbr.rel (0) target = $region41
    $region40: #{encoder_new_forward.13} parent=1 // pred_region
      _
    $region41: #{encoder_new_forward.13} parent=1 // pred_fallthru
      _
    // Predicated region
    $region42: #{encoder_new_forward.13} parent=1 // pred_check
      _
    $region43: #{encoder_new_forward.13} parent=1 // pred_check_branch
      %39 = sbr.rel (0) target = $region45
    $region44: #{encoder_new_forward.13} parent=1 // pred_region
      _
    $region45: #{encoder_new_forward.13} parent=1 // pred_fallthru
      _
    // Predicated region
    $region46: #{encoder_new_forward.13} parent=1 // pred_check
      _
    $region47: #{encoder_new_forward.13} parent=1 // pred_check_branch
      %41 = sbr.rel (0) target = $region49
    $region48: #{encoder_new_forward.13} parent=1 // pred_region
      _
    $region49: #{encoder_new_forward.13} parent=1 // pred_fallthru
      _
    %p43 = scmp.eq.s32.totalorder 0, 0
    // Predicated region
    $region50: #{encoder_new_forward.13} parent=1 // pred_check
      %p44 = pneg %p43
    $region51: #{encoder_new_forward.13} parent=1 // pred_check_branch
      %46 = sbr.rel (%p44) target = $region53
    $region52: #{encoder_new_forward.13} parent=1 // pred_region
      %v47 = vld [vmem:[%s0] sm:$0xf]
      %v48 = vld [vmem:[%s0 + $0x4] sm:$0xf]
      %v49 = vld [vmem:[%s2] sm:$0xf]
      %v50 = vld [vmem:[%s2 + $0x4] sm:$0xf]
      %v51 = vld [vmem:[%s2 + $0x8] sm:$0xf]
      %v52 = vld [vmem:[%s2 + $0xc] sm:$0xf]
      %v53 = vld [vmem:[%s3] sm:$0x1]
      %v55 = vlaneseq
      %v56 = vshrl.u32 %v55, 7
      %v57 = vsub.s32 0, %v56
      %v58 = vrot.slane %v53, %v57
      %v62 = vunpack.c.l.b16 %v47
      %v63 = vunpack.c.l.b16 %v48
      %v64 = vpack.c.b16 %v63, %v62
      %v69 = vunpack.c.l.b16 %v49
      %v70 = vunpack.c.l.b16 %v50
      %v71 = vunpack.c.l.b16 %v51
      %v72 = vunpack.c.l.b16 %v52
      %v73 = vpack.c.b16 %v70, %v69
      %v74 = vpack.c.b16 %v72, %v71
      %vm77 = vcmask 261120
      %v79 = vsel %vm77, %v64, 0
      %81 = vmatprep.subr.bf16.mxu0 0
      %82 = vmatpush1.bf16.msra.mxu0 %v73
      %83 = vmatprep.subr.bf16.mxu0 0
      %84 = vmatpush1.bf16.msra.mxu0 %v74
      %85 = vmatprep.subr.bf16.mxu0 0
      %86 = vmatpush1.bf16.msra.mxu0 0
      %87 = vmatprep.subr.bf16.mxu0 0
      %88 = vmatpush1.bf16.msra.mxu0 0
      %89 = vmatprep.subr.bf16.mxu0 0
      %90 = vmatpush1.bf16.msra.mxu0 0
      %91 = vmatprep.subr.bf16.mxu0 0
      %92 = vmatpush1.bf16.msra.mxu0 0
      %93 = vmatprep.subr.bf16.mxu0 0
      %94 = vmatpush1.bf16.msra.mxu0 0
      %95 = vmatprep.subr.bf16.mxu0 0
      %96 = vmatpush1.bf16.msra.mxu0 0
      %97 = vmatprep.subr.bf16.mxu0 0
      %98 = vmatpush1.bf16.msra.mxu0 0
      %99 = vmatprep.subr.bf16.mxu0 0
      %100 = vmatpush1.bf16.msra.mxu0 0
      %101 = vmatprep.subr.bf16.mxu0 0
      %102 = vmatpush1.bf16.msra.mxu0 0
      %103 = vmatprep.subr.bf16.mxu0 0
      %104 = vmatpush1.bf16.msra.mxu0 0
      %105 = vmatprep.subr.bf16.mxu0 0
      %106 = vmatpush1.bf16.msra.mxu0 0
      %107 = vmatprep.subr.bf16.mxu0 0
      %108 = vmatpush1.bf16.msra.mxu0 0
      %109 = vmatprep.subr.bf16.mxu0 0
      %110 = vmatpush1.bf16.msra.mxu0 0
      %111 = vmatprep.subr.bf16.mxu0 0
      %112 = vmatpush1.bf16.msra.mxu0 0
      %113 = vmatprep.mubr.bf16.mxu0 0
      %114 = vmatmul.mubr.bf16.gmra.mrb[0].mxu0 %v79
      %v115 = vpop.f32.mrb[0].mxu0
      %v116 = vadd.f32 %v58, %v115
      %v117 = vpop.f32.mrb[0].mxu0
      %v118 = vpop.f32.mrb[0].mxu0
      %v119 = vadd.f32 %v58, %v118
      %v120 = vpop.f32.mrb[0].mxu0
      %121 = vdwg.mxu0
      %v122 = vld [vmem:[%s1] sm:$0xff]
      %v123 = vld [vmem:[%s1 + $0x8] sm:$0xff]
      %v124 = vadd.f32 %v122, %v116
      %v125 = vadd.f32 %v123, %v119
      %v126 = vsel %vm77, %v124, 0.0
      %127 = vadd.xlane.f32.xlu0 %v126
      %v128 = vpop.xlane.xlu0 %127
      %v129 = vsel %vm77, %v125, 0.0
      %130 = vadd.xlane.f32.xlu0 %v129
      %v131 = vpop.xlane.xlu0 %130
      %v132 = vrcp.pop 32.0
      %v133 = vmul.f32 %v128, %v132
      %v134 = vmul.f32 %v131, %v132
      %v135 = vsub.f32 %v124, %v133
      %v136 = vsub.f32 %v125, %v134
      %v137 = vmul.f32 %v135, %v135
      %v138 = vmul.f32 %v136, %v136
      %v139 = vsel %vm77, %v137, 0.0
      %140 = vadd.xlane.f32.xlu0 %v139
      %v141 = vpop.xlane.xlu0 %140
      %v142 = vsel %vm77, %v138, 0.0
      %143 = vadd.xlane.f32.xlu0 %v142
      %v144 = vpop.xlane.xlu0 %143
      %v145 = vmul.f32 %v141, %v132
      %v146 = vmul.f32 %v144, %v132
      %v147 = vadd.f32 %v145, 1e-05
      %v148 = vadd.f32 %v146, 1e-05
      %v149 = vrsqrt.pop %v147
      %v150 = vrsqrt.pop %v148
      %v151 = vmul.f32 %v135, %v149
      %v152 = vmul.f32 %v136, %v150
      %v153 = vld [vmem:[%s4] sm:$0x1]
      %v155 = vlaneseq
      %v156 = vshrl.u32 %v155, 7
      %v157 = vsub.s32 0, %v156
      %v158 = vrot.slane %v153, %v157
      %v160 = vmul.f32 %v151, %v158
      %v161 = vmul.f32 %v152, %v158
      %v162 = vld [vmem:[%s5] sm:$0x1]
      %v164 = vlaneseq
      %v165 = vshrl.u32 %v164, 7
      %v166 = vsub.s32 0, %v165
      %v167 = vrot.slane %v162, %v166
      %v169 = vadd.f32 %v160, %v167
      %v170 = vadd.f32 %v161, %v167
      %171 = vst.msk [vmem:[#allocation2] sm:$0xff] %vm77, %v169
      %172 = vst.msk [vmem:[#allocation2 + $0x8] sm:$0xff] %vm77, %v170
      %173 = vst.msk [vmem:[#allocation3] sm:$0xff] %vm77, 0.0
      %174 = vst.msk [vmem:[#allocation3 + $0x8] sm:$0xff] %vm77, 0.0
    $region53: #{encoder_new_forward.13} parent=1 // pred_fallthru
      _
    %v175 = vld [vmem:[#allocation2] sm:$0xff]
    %v176 = vld [vmem:[#allocation2 + $0x8] sm:$0xff]
    %v177 = vpack.c.bf16 %v176, %v175
    %v178 = vld [vmem:[%s6] sm:$0xf]
    %v179 = vld [vmem:[%s6 + $0x4] sm:$0xf]
    %v180 = vld [vmem:[%s6 + $0x8] sm:$0xf]
    %v181 = vld [vmem:[%s6 + $0xc] sm:$0xf]
    %v182 = vld [vmem:[%s7] sm:$0x1]
    %v184 = vlaneseq
    %v185 = vshrl.u32 %v184, 7
    %v186 = vsub.s32 0, %v185
    %v187 = vrot.slane %v182, %v186
    %v193 = vunpack.c.l.b16 %v178
    %v194 = vunpack.c.l.b16 %v179
    %v195 = vunpack.c.l.b16 %v180
    %v196 = vunpack.c.l.b16 %v181
    %v197 = vpack.c.b16 %v194, %v193
    %v198 = vpack.c.b16 %v196, %v195
    %vm201 = vcmask 261120
    %v203 = vsel %vm201, %v177, 0
    %205 = vmatprep.subr.bf16.mxu0 0
    %206 = vmatpush1.bf16.msra.mxu0 %v197
    %207 = vmatprep.subr.bf16.mxu0 0
    %208 = vmatpush1.bf16.msra.mxu0 %v198
    %209 = vmatprep.subr.bf16.mxu0 0
    %210 = vmatpush1.bf16.msra.mxu0 0
    %211 = vmatprep.subr.bf16.mxu0 0
    %212 = vmatpush1.bf16.msra.mxu0 0
    %213 = vmatprep.subr.bf16.mxu0 0
    %214 = vmatpush1.bf16.msra.mxu0 0
    %215 = vmatprep.subr.bf16.mxu0 0
    %216 = vmatpush1.bf16.msra.mxu0 0
    %217 = vmatprep.subr.bf16.mxu0 0
    %218 = vmatpush1.bf16.msra.mxu0 0
    %219 = vmatprep.subr.bf16.mxu0 0
    %220 = vmatpush1.bf16.msra.mxu0 0
    %221 = vmatprep.subr.bf16.mxu0 0
    %222 = vmatpush1.bf16.msra.mxu0 0
    %223 = vmatprep.subr.bf16.mxu0 0
    %224 = vmatpush1.bf16.msra.mxu0 0
    %225 = vmatprep.subr.bf16.mxu0 0
    %226 = vmatpush1.bf16.msra.mxu0 0
    %227 = vmatprep.subr.bf16.mxu0 0
    %228 = vmatpush1.bf16.msra.mxu0 0
    %229 = vmatprep.subr.bf16.mxu0 0
    %230 = vmatpush1.bf16.msra.mxu0 0
    %231 = vmatprep.subr.bf16.mxu0 0
    %232 = vmatpush1.bf16.msra.mxu0 0
    %233 = vmatprep.subr.bf16.mxu0 0
    %234 = vmatpush1.bf16.msra.mxu0 0
    %235 = vmatprep.subr.bf16.mxu0 0
    %236 = vmatpush1.bf16.msra.mxu0 0
    %237 = vmatprep.mubr.bf16.mxu0 0
    %238 = vmatmul.mubr.bf16.gmra.mrb[0].mxu0 %v203
    %v239 = vpop.f32.mrb[0].mxu0
    %v240 = vadd.f32 %v187, %v239
    %v241 = vpop.f32.mrb[0].mxu0
    %v242 = vpop.f32.mrb[0].mxu0
    %v243 = vadd.f32 %v187, %v242
    %v244 = vpop.f32.mrb[0].mxu0
    %245 = vdwg.mxu0
    %v246 = vmax.f32 %v240, 0.0
    %v247 = vmax.f32 %v243, 0.0
    %v248 = vld [vmem:[#allocation3] sm:$0xff]
    %v249 = vld [vmem:[#allocation3 + $0x8] sm:$0xff]
    %v250 = vpack.c.bf16 %v247, %v246
    %v251 = vld [vmem:[%s8] sm:$0xf]
    %v252 = vld [vmem:[%s8 + $0x4] sm:$0xf]
    %v253 = vld [vmem:[%s8 + $0x8] sm:$0xf]
    %v254 = vld [vmem:[%s8 + $0xc] sm:$0xf]
    %v255 = vld [vmem:[%s8 + $0x10] sm:$0xf]
    %v256 = vld [vmem:[%s8 + $0x14] sm:$0xf]
    %v257 = vld [vmem:[%s8 + $0x18] sm:$0xf]
    %v258 = vld [vmem:[%s8 + $0x1c] sm:$0xf]
    %v267 = vunpack.c.l.b16 %v251
    %v268 = vunpack.c.l.b16 %v252
    %v269 = vunpack.c.l.b16 %v253
    %v270 = vunpack.c.l.b16 %v254
    %v271 = vunpack.c.l.b16 %v255
    %v272 = vunpack.c.l.b16 %v256
    %v273 = vunpack.c.l.b16 %v257
    %v274 = vunpack.c.l.b16 %v258
    %v275 = vpack.c.b16 %v268, %v267
    %v276 = vpack.c.b16 %v270, %v269
    %v277 = vpack.c.b16 %v272, %v271
    %v278 = vpack.c.b16 %v274, %v273
    %vm283 = vcmask 523264
    %v285 = vsel %vm283, %v250, 0
    %287 = vmatprep.subr.bf16.mxu0 0
    %288 = vmatpush1.bf16.msra.mxu0 %v275
    %289 = vmatprep.subr.bf16.mxu0 0
    %290 = vmatpush1.bf16.msra.mxu0 %v276
    %291 = vmatprep.subr.bf16.mxu0 0
    %292 = vmatpush1.bf16.msra.mxu0 %v277
    %293 = vmatprep.subr.bf16.mxu0 0
    %294 = vmatpush1.bf16.msra.mxu0 %v278
    %295 = vmatprep.subr.bf16.mxu0 0
    %296 = vmatpush1.bf16.msra.mxu0 0
    %297 = vmatprep.subr.bf16.mxu0 0
    %298 = vmatpush1.bf16.msra.mxu0 0
    %299 = vmatprep.subr.bf16.mxu0 0
    %300 = vmatpush1.bf16.msra.mxu0 0
    %301 = vmatprep.subr.bf16.mxu0 0
    %302 = vmatpush1.bf16.msra.mxu0 0
    %303 = vmatprep.subr.bf16.mxu0 0
    %304 = vmatpush1.bf16.msra.mxu0 0
    %305 = vmatprep.subr.bf16.mxu0 0
    %306 = vmatpush1.bf16.msra.mxu0 0
    %307 = vmatprep.subr.bf16.mxu0 0
    %308 = vmatpush1.bf16.msra.mxu0 0
    %309 = vmatprep.subr.bf16.mxu0 0
    %310 = vmatpush1.bf16.msra.mxu0 0
    %311 = vmatprep.subr.bf16.mxu0 0
    %312 = vmatpush1.bf16.msra.mxu0 0
    %313 = vmatprep.subr.bf16.mxu0 0
    %314 = vmatpush1.bf16.msra.mxu0 0
    %315 = vmatprep.subr.bf16.mxu0 0
    %316 = vmatpush1.bf16.msra.mxu0 0
    %317 = vmatprep.subr.bf16.mxu0 0
    %318 = vmatpush1.bf16.msra.mxu0 0
    %319 = vmatprep.mubr.bf16.mxu0 0
    %320 = vmatmul.mubr.bf16.gmra.mrb[0].mxu0 %v285
    %v321 = vpop.f32.mrb[0].mxu0
    %v322 = vadd.f32 0.0, %v321
    %v323 = vpop.f32.mrb[0].mxu0
    %v324 = vpop.f32.mrb[0].mxu0
    %v325 = vadd.f32 0.0, %v324
    %v326 = vpop.f32.mrb[0].mxu0
    %327 = vdwg.mxu0
    %v328 = vadd.f32 %v248, %v322
    %v329 = vadd.f32 %v249, %v325
    %330 = vst.msk [vmem:[#allocation3] sm:$0xff] %vm201, %v328
    %331 = vst.msk [vmem:[#allocation3 + $0x8] sm:$0xff] %vm201, %v329
    // Predicated region
    $region54: #{encoder_new_forward.13} parent=1 // pred_check
      %p332 = pneg %p43
    $region55: #{encoder_new_forward.13} parent=1 // pred_check_branch
      %334 = sbr.rel (%p332) target = $region57
    $region56: #{encoder_new_forward.13} parent=1 // pred_region
      %v335 = vld [vmem:[#allocation2] sm:$0xff]
      %v336 = vld [vmem:[#allocation2 + $0x8] sm:$0xff]
      %v337 = vld [vmem:[#allocation3] sm:$0xff]
      %v338 = vld [vmem:[#allocation3 + $0x8] sm:$0xff]
      %v339 = vadd.f32 %v335, %v337
      %v340 = vadd.f32 %v336, %v338
      %v341 = vld [vmem:[%s9] sm:$0x1]
      %v343 = vlaneseq
      %v344 = vshrl.u32 %v343, 7
      %v345 = vsub.s32 0, %v344
      %v346 = vrot.slane %v341, %v345
      %v348 = vadd.f32 %v339, %v346
      %v349 = vadd.f32 %v340, %v346
      %v350 = vsel %vm201, %v348, 0.0
      %351 = vadd.xlane.f32.xlu0 %v350
      %v352 = vpop.xlane.xlu0 %351
      %v353 = vsel %vm201, %v349, 0.0
      %354 = vadd.xlane.f32.xlu0 %v353
      %v355 = vpop.xlane.xlu0 %354
      %v356 = vrcp.pop 32.0
      %v357 = vmul.f32 %v352, %v356
      %v358 = vmul.f32 %v355, %v356
      %v359 = vsub.f32 %v348, %v357
      %v360 = vsub.f32 %v349, %v358
      %v361 = vmul.f32 %v359, %v359
      %v362 = vmul.f32 %v360, %v360
      %v363 = vsel %vm201, %v361, 0.0
      %364 = vadd.xlane.f32.xlu0 %v363
      %v365 = vpop.xlane.xlu0 %364
      %v366 = vsel %vm201, %v362, 0.0
      %367 = vadd.xlane.f32.xlu0 %v366
      %v368 = vpop.xlane.xlu0 %367
      %v369 = vmul.f32 %v365, %v356
      %v370 = vmul.f32 %v368, %v356
      %v371 = vadd.f32 %v369, 1e-05
      %v372 = vadd.f32 %v370, 1e-05
      %v373 = vrsqrt.pop %v371
      %v374 = vrsqrt.pop %v372
      %v375 = vmul.f32 %v359, %v373
      %v376 = vmul.f32 %v360, %v374
      %v377 = vld [vmem:[%s10] sm:$0x1]
      %v379 = vlaneseq
      %v380 = vshrl.u32 %v379, 7
      %v381 = vsub.s32 0, %v380
      %v382 = vrot.slane %v377, %v381
      %v384 = vmul.f32 %v375, %v382
      %v385 = vmul.f32 %v376, %v382
      %v386 = vld [vmem:[%s11] sm:$0x1]
      %v388 = vlaneseq
      %v389 = vshrl.u32 %v388, 7
      %v390 = vsub.s32 0, %v389
      %v391 = vrot.slane %v386, %v390
      %v393 = vadd.f32 %v384, %v391
      %v394 = vadd.f32 %v385, %v391
      %395 = vst.msk [vmem:[#allocation4] sm:$0xff] %vm201, %v393
      %396 = vst.msk [vmem:[#allocation4 + $0x8] sm:$0xff] %vm201, %v394
    $region57: #{encoder_new_forward.13} parent=1 // pred_fallthru
      _
    // Predicated region
    $region58: #{encoder_new_forward.13} parent=1 // pred_check
      _
    $region59: #{encoder_new_forward.13} parent=1 // pred_check_branch
      %398 = sbr.rel (0) target = $region61
    $region60: #{encoder_new_forward.13} parent=1 // pred_region
      %s400 = ssub.s32 256, 256
      %401 = vsyncadd [#allocation5], %s400
      %s402 = sshll.u32 [#allocation4], 4
      %s403 = int_to_ptr.vmem [resolvable:$true] %s402
      %408 = dma.vmem_to_hbm [thread:$0]  %s403, 256, %s12, [#allocation5], 128, 128, 8
    $region61: #{encoder_new_forward.13} parent=1 // pred_fallthru
      _
    // Predicated region
    $region62: #{encoder_new_forward.13} parent=1 // pred_check
      _
    $region63: #{encoder_new_forward.13} parent=1 // pred_check_branch
      %410 = sbr.rel (0) target = $region65
    $region64: #{encoder_new_forward.13} parent=1 // pred_region
      %411 = dma.done [#allocation5], 256
    $region65: #{encoder_new_forward.13} parent=1 // pred_fallthru
      _
    %412 = vsyncpa [#allocation5], 1

</llo_original>
